<compile_context>
chip_gen: v6e
topology: v6e:2x2x1
jax: 0.10.0
libtpu: 0.0.40
codegen_flags: <defaults>
</compile_context>

<pallas_src>
import math

import jax
import jax.numpy as jnp
from jax.experimental import pallas as pl
from jax.experimental.pallas import tpu as pltpu


def _round_up(x, m):
    return ((x + m - 1) // m) * m


def _wpm_kernel(x_ref, w1_ref, b1_ref, w2_ref, b2_ref, o_ref):
    # x_ref : (tm, 3)        row tile of offset vectors (f32)
    # w1_ref: (3, hidden)    first linear weight (in, out), f32
    # b1_ref: (1, hidden)    f32
    # w2_ref: (hidden, tn)   second linear weight column tile (f32 or bf16)
    # b2_ref: (1, tn)        f32
    # o_ref : (tm, tn)       output tile
    x = x_ref[...].astype(jnp.float32)
    w1 = w1_ref[...].astype(jnp.float32)

    # K=3 contraction done on the VPU as three broadcast FMAs -- keeps the MXU
    # free for the big second GEMM and avoids a narrow (tm, 3) MXU operand.
    h = (x[:, 0:1] * w1[0:1, :]
         + x[:, 1:2] * w1[1:2, :]
         + x[:, 2:3] * w1[2:3, :]
         + b1_ref[...])
    h = jnp.maximum(h, 0.0)                                   # ReLU in f32

    # Second layer on the MXU, f32 accumulation (bf16 operands if requested).
    y = jnp.dot(h.astype(w2_ref.dtype), w2_ref[...],
                preferred_element_type=jnp.float32)
    y = y + b2_ref[...]
    o_ref[...] = y.astype(o_ref.dtype)


def wpm_forward(offset_vector, params, HR_size, k, inC, outC, *,
                tm=256, tn=512, use_bf16_mxu=True, out_dtype=jnp.float32):
    """offset_vector: (N, 3) with N == HR_size[0] * HR_size[1].

    Returns (N, outC, inC, k, k), matching WPM.forward's .view(...)."""
    w1, b1, w2, b2 = params
    N = offset_vector.shape[0]
    assert N == HR_size[0] * HR_size[1]
    hidden = w1.shape[1]
    out_f = k * k * inC * outC
    assert w2.shape == (hidden, out_f)

    # --- tile choices: row tile multiple of 8 (f32 sublanes), col tile mult of 128.
    tm = max(8, min(tm, _round_up(N, 8)))
    tm = _round_up(tm, 8)
    tn = max(128, min(tn, _round_up(out_f, 128)))
    tn = _round_up(tn, 128)

    N_pad = _round_up(N, tm)
    out_f_pad = _round_up(out_f, tn)

    # --- pad so every block is full; padded rows/cols are sliced off below.
    x = offset_vector.astype(jnp.float32)
    if N_pad != N:
        x = jnp.pad(x, ((0, N_pad - N), (0, 0)))

    w1_p = w1.astype(jnp.float32)
    b1_p = b1.reshape(1, hidden).astype(jnp.float32)
    w2_p = w2
    b2_p = b2.reshape(1, out_f).astype(jnp.float32)
    if out_f_pad != out_f:
        w2_p = jnp.pad(w2_p, ((0, 0), (0, out_f_pad - out_f)))
        b2_p = jnp.pad(b2_p, ((0, 0), (0, out_f_pad - out_f)))
    w2_p = w2_p.astype(jnp.bfloat16 if use_bf16_mxu else jnp.float32)

    # out_f axis OUTER (j), row axis INNER (i): the (hidden, tn) W2 tile's block
    # index only changes with j, so it stays resident while cheap x tiles stream.
    grid = (out_f_pad // tn, N_pad // tm)

    flat = pl.pallas_call(
        _wpm_kernel,
        out_shape=jax.ShapeDtypeStruct((N_pad, out_f_pad), out_dtype),
        grid_spec=pltpu.PrefetchScalarGridSpec(
            num_scalar_prefetch=0,
            grid=grid,
            in_specs=[
                pl.BlockSpec((tm, 3), lambda j, i: (i, 0)),        # x rows
                pl.BlockSpec((3, hidden), lambda j, i: (0, 0)),    # W1 (whole)
                pl.BlockSpec((1, hidden), lambda j, i: (0, 0)),    # b1 (whole)
                pl.BlockSpec((hidden, tn), lambda j, i: (0, j)),   # W2 col tile
                pl.BlockSpec((1, tn), lambda j, i: (0, j)),        # b2 col tile
            ],
            out_specs=pl.BlockSpec((tm, tn), lambda j, i: (i, j)),
        ),
        compiler_params=pltpu.CompilerParams(
            dimension_semantics=("parallel", "parallel"),  # megacore-shardable
            vmem_limit_bytes=48 * 1024 * 1024,             # fits v5e/v6e/v7x
        ),
    )(x, w1_p, b1_p, w2_p, b2_p)

    # glue: drop padding, then the .view(...) of the PyTorch module.
    flat = flat[:N, :out_f]
    return flat.reshape((HR_size[0] * HR_size[1], outC, inC, k, k))


def init_wpm_params(key, k, inC, outC, hidden=256):
    """Deterministic init mimicking nn.Linear default (uniform +- 1/sqrt(fan_in)).
    Weights stored as (in_features, out_features)."""
    out_f = k * k * inC * outC
    k1, k2, k3, k4 = jax.random.split(key, 4)
    bound1 = 1.0 / math.sqrt(3.0)
    bound2 = 1.0 / math.sqrt(hidden)
    w1 = jax.random.uniform(k1, (3, hidden), jnp.float32, -bound1, bound1)
    b1 = jax.random.uniform(k2, (1, hidden), jnp.float32, -bound1, bound1)
    w2 = jax.random.uniform(k3, (hidden, out_f), jnp.float32, -bound2, bound2)
    b2 = jax.random.uniform(k4, (1, out_f), jnp.float32, -bound2, bound2)
    return (w1, b1, w2, b2)


if __name__ == "__main__":
    # small, shape-consistent example: k=3, inC=4, outC=8 -> out_f = 288
    k, inC, outC = 3, 4, 8
    HR_size = (16, 24)                       # N = 384 offset vectors
    N = HR_size[0] * HR_size[1]

    key = jax.random.PRNGKey(0)
    kp, kx = jax.random.split(key)
    params = init_wpm_params(kp, k, inC, outC)
    offset_vector = jax.random.normal(kx, (N, 3), jnp.float32)
    w1, b1, w2, b2 = params

    # pure-JAX fp32 reference (same math as the PyTorch module)
    h_ref = jnp.maximum(offset_vector @ w1 + b1.reshape(1, -1), 0.0)
    ref_f32 = (h_ref @ w2 + b2.reshape(1, -1)).reshape((N, outC, inC, k, k))

    # 1) exact f32 MXU path
    out_f32 = wpm_forward(offset_vector, params, HR_size, k, inC, outC,
                          use_bf16_mxu=False)
    out_f32 = jax.block_until_ready(out_f32)
    assert out_f32.shape == (N, outC, inC, k, k)
    assert jnp.allclose(out_f32, ref_f32, atol=1e-4, rtol=1e-4)

    # 2) fast bf16-MXU path (f32 accumulation), smaller column tile to exercise
    #    the out_f grid axis and row padding (N=384 -> N_pad=512 with tm=256).
    out_bf16 = wpm_forward(offset_vector, params, HR_size, k, inC, outC,
                           use_bf16_mxu=True, tn=128)
    out_bf16 = jax.block_until_ready(out_bf16)
    assert out_bf16.shape == (N, outC, inC, k, k)
    ref_bf16 = (jnp.dot(h_ref.astype(jnp.bfloat16), w2.astype(jnp.bfloat16),
                        preferred_element_type=jnp.float32)
                + b2.reshape(1, -1)).reshape((N, outC, inC, k, k))
    assert jnp.allclose(out_bf16, ref_bf16, atol=5e-2, rtol=5e-2)

    print("KERNEL_OK")
</pallas_src>

<mosaic_0001>
module attributes {stable_mosaic.version = 11 : i64} {
  func.func @_wpm_kernel(%arg0: i32, %arg1: i32, %arg2: memref<256x3xf32, #tpu.memory_space<vmem>>, %arg3: memref<3x256xf32, #tpu.memory_space<vmem>>, %arg4: memref<1x256xf32, #tpu.memory_space<vmem>>, %arg5: memref<256x384xf32, #tpu.memory_space<vmem>>, %arg6: memref<1x384xf32, #tpu.memory_space<vmem>>, %arg7: memref<256x384xf32, #tpu.memory_space<vmem>>) attributes {dimension_semantics = [#tpu.dimension_semantics<parallel>, #tpu.dimension_semantics<parallel>], iteration_bounds = array<i64: 1, 2>, scalar_prefetch = 0 : i64, scratch_operands = 0 : i64, tpu.core_type = #tpu.core_type<tc>, window_params = [{transform_indices = @transform_0, window_bounds = array<i64: 256, 3>}, {pipeline_mode = #tpu.pipeline_mode<synchronous>, transform_indices = @transform_1, window_bounds = array<i64: 3, 256>}, {pipeline_mode = #tpu.pipeline_mode<synchronous>, transform_indices = @transform_2, window_bounds = array<i64: 1, 256>}, {transform_indices = @transform_3, window_bounds = array<i64: 256, 384>}, {transform_indices = @transform_4, window_bounds = array<i64: 1, 384>}, {transform_indices = @transform_5, window_bounds = array<i64: 256, 384>}]} {
    %c0 = arith.constant 0 : index
    %c0_0 = arith.constant 0 : index
    %0 = vector.load %arg2[%c0, %c0_0] : memref<256x3xf32, #tpu.memory_space<vmem>>, vector<256x3xf32>
    %c0_1 = arith.constant 0 : index
    %c0_2 = arith.constant 0 : index
    %1 = vector.load %arg3[%c0_1, %c0_2] : memref<3x256xf32, #tpu.memory_space<vmem>>, vector<3x256xf32>
    %2 = vector.extract_strided_slice %0 {offsets = [0, 0], sizes = [256, 1], strides = [1, 1]} : vector<256x3xf32> to vector<256x1xf32>
    %3 = vector.extract_strided_slice %1 {offsets = [0, 0], sizes = [1, 256], strides = [1, 1]} : vector<3x256xf32> to vector<1x256xf32>
    %4 = vector.broadcast %2 : vector<256x1xf32> to vector<256x256xf32>
    %5 = vector.broadcast %3 : vector<1x256xf32> to vector<256x256xf32>
    %6 = arith.mulf %4, %5 : vector<256x256xf32>
    %7 = vector.extract_strided_slice %0 {offsets = [0, 1], sizes = [256, 1], strides = [1, 1]} : vector<256x3xf32> to vector<256x1xf32>
    %8 = vector.extract_strided_slice %1 {offsets = [1, 0], sizes = [1, 256], strides = [1, 1]} : vector<3x256xf32> to vector<1x256xf32>
    %9 = vector.broadcast %7 : vector<256x1xf32> to vector<256x256xf32>
    %10 = vector.broadcast %8 : vector<1x256xf32> to vector<256x256xf32>
    %11 = arith.mulf %9, %10 : vector<256x256xf32>
    %12 = arith.addf %6, %11 : vector<256x256xf32>
    %13 = vector.extract_strided_slice %0 {offsets = [0, 2], sizes = [256, 1], strides = [1, 1]} : vector<256x3xf32> to vector<256x1xf32>
    %14 = vector.extract_strided_slice %1 {offsets = [2, 0], sizes = [1, 256], strides = [1, 1]} : vector<3x256xf32> to vector<1x256xf32>
    %15 = vector.broadcast %13 : vector<256x1xf32> to vector<256x256xf32>
    %16 = vector.broadcast %14 : vector<1x256xf32> to vector<256x256xf32>
    %17 = arith.mulf %15, %16 : vector<256x256xf32>
    %18 = arith.addf %12, %17 : vector<256x256xf32>
    %c0_3 = arith.constant 0 : index
    %c0_4 = arith.constant 0 : index
    %19 = vector.load %arg4[%c0_3, %c0_4] : memref<1x256xf32, #tpu.memory_space<vmem>>, vector<1x256xf32>
    %20 = vector.broadcast %19 : vector<1x256xf32> to vector<256x256xf32>
    %21 = arith.addf %18, %20 : vector<256x256xf32>
    %cst = arith.constant 0.000000e+00 : f32
    %22 = vector.broadcast %cst : f32 to vector<256x256xf32>
    %23 = arith.maximumf %21, %22 : vector<256x256xf32>
    %c0_5 = arith.constant 0 : index
    %c0_6 = arith.constant 0 : index
    %24 = vector.load %arg5[%c0_5, %c0_6] : memref<256x384xf32, #tpu.memory_space<vmem>>, vector<256x384xf32>
    %cst_7 = arith.constant dense<0.000000e+00> : vector<256x384xf32>
    %25 = tpu.matmul %23, %24, %cst_7 {dimension_numbers = #tpu.dot_dimension_numbers<[1], [0], [0], [1], [0, 0, 1, 1], [], []>} : vector<256x256xf32>, vector<256x384xf32>, vector<256x384xf32> -> vector<256x384xf32>
    %c0_8 = arith.constant 0 : index
    %c0_9 = arith.constant 0 : index
    %26 = vector.load %arg6[%c0_8, %c0_9] : memref<1x384xf32, #tpu.memory_space<vmem>>, vector<1x384xf32>
    %27 = vector.broadcast %26 : vector<1x384xf32> to vector<256x384xf32>
    %28 = arith.addf %25, %27 : vector<256x384xf32>
    %c0_10 = arith.constant 0 : index
    %c0_11 = arith.constant 0 : index
    %29 = vector.load %arg7[%c0_10, %c0_11] : memref<256x384xf32, #tpu.memory_space<vmem>>, vector<256x384xf32>
    tpu.vector_store %arg7[%c0_10, %c0_11], %28 {strides = array<i32>} : memref<256x384xf32, #tpu.memory_space<vmem>>, vector<256x384xf32>,
    return
  }
  func.func @transform_0(%arg0: i32, %arg1: i32) -> (i32, i32) {
    %c0_i32 = arith.constant 0 : i32
    %c0_i32_0 = arith.constant 0 : i32
    return %arg1, %c0_i32 : i32, i32
  }
  func.func @transform_1(%arg0: i32, %arg1: i32) -> (i32, i32) {
    %c0_i32 = arith.constant 0 : i32
    %c0_i32_0 = arith.constant 0 : i32
    %c0_i32_1 = arith.constant 0 : i32
    return %c0_i32, %c0_i32_0 : i32, i32
  }
  func.func @transform_2(%arg0: i32, %arg1: i32) -> (i32, i32) {
    %c0_i32 = arith.constant 0 : i32
    %c0_i32_0 = arith.constant 0 : i32
    %c0_i32_1 = arith.constant 0 : i32
    return %c0_i32, %c0_i32_0 : i32, i32
  }
  func.func @transform_3(%arg0: i32, %arg1: i32) -> (i32, i32) {
    %c0_i32 = arith.constant 0 : i32
    %c0_i32_0 = arith.constant 0 : i32
    return %c0_i32, %arg0 : i32, i32
  }
  func.func @transform_4(%arg0: i32, %arg1: i32) -> (i32, i32) {
    %c0_i32 = arith.constant 0 : i32
    %c0_i32_0 = arith.constant 0 : i32
    return %c0_i32, %arg0 : i32, i32
  }
  func.func @transform_5(%arg0: i32, %arg1: i32) -> (i32, i32) {
    %c0_i32 = arith.constant 0 : i32
    return %arg1, %arg0 : i32, i32
  }
}

</mosaic_0001>

<llo_original>
// kernel: tpu_custom_call.1
$region0: #{tpu_custom_call.1}
  #allocation0 [shape = 'u32[]', space=smem, size = 0x4, offset = 0x4, fixed_abs, tag = 'smem constant byte address 0x4 - core index']
  #allocation1 [shape = 'u32[144,128]{1,0:T(1,128)}', space=vmem, size = 0x12000, scoped, tag = 'internal scratch']
  %s0 = inlined_call_operand.vmem [shape: f32[512,3], index: 0, kind: input, shape index: {}]
  %s1 = inlined_call_operand.vmem [shape: f32[3,256], index: 1, kind: input, shape index: {}]
  %s2 = inlined_call_operand.vmem [shape: f32[1,256], index: 2, kind: input, shape index: {}]
  %s3 = inlined_call_operand.hbm [shape: f32[256,384], index: 3, kind: input, shape index: {}]
  %s4 = inlined_call_operand.vmem [shape: f32[1,384], index: 4, kind: input, shape index: {}]
  %s5 = inlined_call_operand.hbm [shape: f32[512,384], index: 5, kind: output, shape index: {}]
  %s6 = sld [smem:[#allocation0]]
  $region57: #{tpu_custom_call.1} parent=0
    _
  %s8 = ssub.s32 1, %s6
  %s9 = scalar_select 0, %s8, %s6
  $region1: #{tpu_custom_call.1} parent=0
    #allocation2 [shape = 'u8[393216]{0}', space=vmem, size = 0x60000, scoped, tag = 'input window, operand 3, single buffered']
    #allocation3 [shape = 's32[2]{0}', space=sflag, size = 0x8, scoped, tag = 'scoped memory for tpu_custom_call.1']
    #allocation4 [shape = 's32[2]{0}', space=sflag, size = 0x8, scoped, tag = 'scoped memory for tpu_custom_call.1']
    #allocation5 [shape = 'u8[786432]{0}', space=vmem, size = 0xc0000, scoped, tag = 'output window, operand 0']
    %10 = vsyncpa [#allocation3], 0
    %11 = vsyncpa [#allocation4], 0
    %s12 = scalar_lea.sflag [#allocation4], 1
    %13 = vsyncpa %s12, 0
    loop: start=0, step=1, limit=4
    $region2: #{tpu_custom_call.1} parent=1 // loop_pre_header
      _
    $region3: #{tpu_custom_call.1} parent=1 // loop_header
      %s15 = sphi 0, %s19
      %p16 = scmp.ge.s32.totalorder %s15, 4
      %s22 = sphi 0, %s34
      %s23 = sphi 0, %s30
      %s24 = sphi 0, %s22
      %s25 = sphi 0, %s23
      %s26 = sphi 0, %s24
      %s27 = sphi 0, %s25
      %s37 = sphi 0, %s39
      %s40 = sphi 0, %s37
      %s41 = sphi 0, %s40
      %s57 = sphi 0, %s41
      %s61 = sphi 0, %s61
      %s63 = sphi 0, %s61
      %s64 = sphi 0, %s63
      %s78 = sphi 0, %s64
      %s82 = sphi 0, %s82
      %s84 = sphi 0, %s82
      %s85 = sphi 0, %s84
      %s99 = sphi 0, %s85
      %s105 = sphi 0, %s107
      %s108 = sphi 0, %s105
      %s109 = sphi 0, %s108
      %s125 = sphi 0, %s109
      %s131 = sphi 0, %s133
      %s134 = sphi 0, %s131
      %s135 = sphi 0, %s134
      %s151 = sphi 0, %s135
      %s159 = sphi 0, %s161
      %s162 = sphi 0, %s159
      %s163 = sphi 0, %s162
      %s179 = sphi 0, %s163
    $region4: #{tpu_custom_call.1} parent=1 // loop_header_branch
      %18 = sbr.rel (%p16) target = $region8
    $region5: #{tpu_custom_call.1} parent=1 // loop_body
      %s20 = ssub.s32 %s15, 1
      %s21 = ssub.s32 %s15, 2
      %s28 = sadd.s32 1, %s23
      %p29 = scmp.ge.s32.totalorder %s28, 2
      %s30 = scalar_select %p29, 0, %s28
      %s31 = sadd.s32 1, %s22
      %s32 = scalar_select %p29, %s31, %s22
      %p33 = scmp.ge.s32.totalorder %s32, 1
      %s34 = scalar_select %p33, 0, %s32
      %s35 = ssub.s32 %s23, %s30
      %p36 = scmp.eq.s32.totalorder %s35, 0
      %s38 = sadd.s32 %s37, 1
      %s39 = scalar_select %p36, %s37, %s38
      %p42 = pneg %p36
      %p43 = scmp.eq.s32.totalorder %s15, 1
      %p44 = por %p42, %p43
      %p45 = scmp.ne.s32.totalorder %s37, %s40
      %p46 = scmp.eq.s32.totalorder %s15, 0
      %p47 = por %p45, %p46
      %p48 = scmp.ne.s32.totalorder %s37, %s40
      %p49 = scmp.eq.s32.totalorder %s20, 1
      %p50 = por %p48, %p49
      %p51 = scmp.ne.s32.totalorder %s40, %s41
      %p52 = scmp.eq.s32.totalorder %s20, 0
      %p53 = por %p51, %p52
      %p54 = scmp.ne.s32.totalorder %s40, %s41
      %p55 = scmp.eq.s32.totalorder %s21, 1
      %p56 = por %p54, %p55
      %p58 = scmp.ne.s32.totalorder %s41, %s57
      %p59 = scmp.eq.s32.totalorder %s21, 0
      %p60 = por %p58, %p59
      %s62 = sadd.s32 %s61, 1
      %p65 = scmp.eq.s32.totalorder %s15, 1
      %p66 = scmp.ne.s32.totalorder %s61, %s63
      %p67 = scmp.eq.s32.totalorder %s15, 0
      %p68 = por %p66, %p67
      %p69 = scmp.ne.s32.totalorder %s61, %s63
      %p70 = scmp.eq.s32.totalorder %s20, 1
      %p71 = por %p69, %p70
      %p72 = scmp.ne.s32.totalorder %s63, %s64
      %p73 = scmp.eq.s32.totalorder %s20, 0
      %p74 = por %p72, %p73
      %p75 = scmp.ne.s32.totalorder %s63, %s64
      %p76 = scmp.eq.s32.totalorder %s21, 1
      %p77 = por %p75, %p76
      %p79 = scmp.ne.s32.totalorder %s64, %s78
      %p80 = scmp.eq.s32.totalorder %s21, 0
      %p81 = por %p79, %p80
      %s83 = sadd.s32 %s82, 1
      %p86 = scmp.eq.s32.totalorder %s15, 1
      %p87 = scmp.ne.s32.totalorder %s82, %s84
      %p88 = scmp.eq.s32.totalorder %s15, 0
      %p89 = por %p87, %p88
      %p90 = scmp.ne.s32.totalorder %s82, %s84
      %p91 = scmp.eq.s32.totalorder %s20, 1
      %p92 = por %p90, %p91
      %p93 = scmp.ne.s32.totalorder %s84, %s85
      %p94 = scmp.eq.s32.totalorder %s20, 0
      %p95 = por %p93, %p94
      %p96 = scmp.ne.s32.totalorder %s84, %s85
      %p97 = scmp.eq.s32.totalorder %s21, 1
      %p98 = por %p96, %p97
      %p100 = scmp.ne.s32.totalorder %s85, %s99
      %p101 = scmp.eq.s32.totalorder %s21, 0
      %p102 = por %p100, %p101
      %s103 = ssub.s32 %s22, %s34
      %p104 = scmp.eq.s32.totalorder %s103, 0
      %s106 = sadd.s32 %s105, 1
      %s107 = scalar_select %p104, %s105, %s106
      %p110 = pneg %p104
      %p111 = scmp.eq.s32.totalorder %s15, 1
      %p112 = por %p110, %p111
      %p113 = scmp.ne.s32.totalorder %s105, %s108
      %p114 = scmp.eq.s32.totalorder %s15, 0
      %p115 = por %p113, %p114
      %p116 = scmp.ne.s32.totalorder %s105, %s108
      %p117 = scmp.eq.s32.totalorder %s20, 1
      %p118 = por %p116, %p117
      %p119 = scmp.ne.s32.totalorder %s108, %s109
      %p120 = scmp.eq.s32.totalorder %s20, 0
      %p121 = por %p119, %p120
      %p122 = scmp.ne.s32.totalorder %s108, %s109
      %p123 = scmp.eq.s32.totalorder %s21, 1
      %p124 = por %p122, %p123
      %p126 = scmp.ne.s32.totalorder %s109, %s125
      %p127 = scmp.eq.s32.totalorder %s21, 0
      %p128 = por %p126, %p127
      %s129 = ssub.s32 %s22, %s34
      %p130 = scmp.eq.s32.totalorder %s129, 0
      %s132 = sadd.s32 %s131, 1
      %s133 = scalar_select %p130, %s131, %s132
      %p136 = pneg %p130
      %p137 = scmp.eq.s32.totalorder %s15, 1
      %p138 = por %p136, %p137
      %p139 = scmp.ne.s32.totalorder %s131, %s134
      %p140 = scmp.eq.s32.totalorder %s15, 0
      %p141 = por %p139, %p140
      %p142 = scmp.ne.s32.totalorder %s131, %s134
      %p143 = scmp.eq.s32.totalorder %s20, 1
      %p144 = por %p142, %p143
      %p145 = scmp.ne.s32.totalorder %s134, %s135
      %p146 = scmp.eq.s32.totalorder %s20, 0
      %p147 = por %p145, %p146
      %p148 = scmp.ne.s32.totalorder %s134, %s135
      %p149 = scmp.eq.s32.totalorder %s21, 1
      %p150 = por %p148, %p149
      %p152 = scmp.ne.s32.totalorder %s135, %s151
      %p153 = scmp.eq.s32.totalorder %s21, 0
      %p154 = por %p152, %p153
      %s155 = ssub.s32 %s23, %s30
      %s156 = ssub.s32 %s22, %s34
      %s157 = sor.u32 %s155, %s156
      %p158 = scmp.eq.s32.totalorder %s157, 0
      %s160 = sadd.s32 %s159, 1
      %s161 = scalar_select %p158, %s159, %s160
      %p164 = pneg %p158
      %p165 = scmp.eq.s32.totalorder %s15, 1
      %p166 = por %p164, %p165
      %p167 = scmp.ne.s32.totalorder %s159, %s162
      %p168 = scmp.eq.s32.totalorder %s15, 0
      %p169 = por %p167, %p168
      %p170 = scmp.ne.s32.totalorder %s159, %s162
      %p171 = scmp.eq.s32.totalorder %s20, 1
      %p172 = por %p170, %p171
      %p173 = scmp.ne.s32.totalorder %s162, %s163
      %p174 = scmp.eq.s32.totalorder %s20, 0
      %p175 = por %p173, %p174
      %p176 = scmp.ne.s32.totalorder %s162, %s163
      %p177 = scmp.eq.s32.totalorder %s21, 1
      %p178 = por %p176, %p177
      %p180 = scmp.ne.s32.totalorder %s163, %s179
      %p181 = scmp.eq.s32.totalorder %s21, 0
      %p182 = por %p180, %p181
      %p183 = scmp.le.s32.totalorder 1, %s15
      %p184 = scmp.lt.s32.totalorder %s15, 3
      %p185 = pnand %p183, %p184
      %p186 = pneg %p185
      // Predicated region
      $region9: #{tpu_custom_call.1} parent=5 // pred_check
        _
      $region10: #{tpu_custom_call.1} parent=5 // pred_check_branch
        %188 = sbr.rel (%p185) target = $region12
      $region11: #{tpu_custom_call.1} parent=5 // pred_region
        %s189 = ssub.s32 %s15, 1
        // Predicated region
        $region13: #{tpu_custom_call.1} parent=11 // pred_check
          %p190 = pneg %p74
        $region14: #{tpu_custom_call.1} parent=11 // pred_check_branch
          %192 = sbr.rel (%p190) target = $region16
        $region15: #{tpu_custom_call.1} parent=11 // pred_region
          _
        $region16: #{tpu_custom_call.1} parent=11 // pred_fallthru
          _
        // Predicated region
        $region17: #{tpu_custom_call.1} parent=11 // pred_check
          %p193 = pneg %p95
        $region18: #{tpu_custom_call.1} parent=11 // pred_check_branch
          %195 = sbr.rel (%p193) target = $region20
        $region19: #{tpu_custom_call.1} parent=11 // pred_region
          _
        $region20: #{tpu_custom_call.1} parent=11 // pred_fallthru
          _
        // Predicated region
        $region21: #{tpu_custom_call.1} parent=11 // pred_check
          %p196 = pneg %p121
        $region22: #{tpu_custom_call.1} parent=11 // pred_check_branch
          %198 = sbr.rel (%p196) target = $region24
        $region23: #{tpu_custom_call.1} parent=11 // pred_region
          %s199 = smul.u32 3, %s24
          %s201 = ssub.s32 12288, 12288
          %202 = vsyncadd [#allocation3], %s201
          %s203 = smul.addr %s199, 128
          %s204 = scalar_lea.hbm %s3, %s203
          %s205 = sshll.u32 [#allocation2], 4
          %s206 = int_to_ptr.vmem [resolvable:$true] %s205
          %211 = dma.hbm_to_vmem [thread:$0]  %s204, 12288, %s206, [#allocation3], 384, 384, 24
        $region24: #{tpu_custom_call.1} parent=11 // pred_fallthru
          _
        // Predicated region
        $region25: #{tpu_custom_call.1} parent=11 // pred_check
          %p212 = pneg %p147
        $region26: #{tpu_custom_call.1} parent=11 // pred_check_branch
          %214 = sbr.rel (%p212) target = $region28
        $region27: #{tpu_custom_call.1} parent=11 // pred_region
          %s215 = smul.u32 3, %s24
          %p216 = scmp.lt.s32.totalorder %s215, 2
          %s217 = scalar_select %p216, %s215, 2
          %s218 = scalar_lea.vmem %s4, %s217
          %s219 = smul.u32 3, %s24
        $region28: #{tpu_custom_call.1} parent=11 // pred_fallthru
          _
      $region12: #{tpu_custom_call.1} parent=5 // pred_fallthru
        _
      %p220 = scmp.lt.s32.totalorder %s15, 2
      // Predicated region
      $region29: #{tpu_custom_call.1} parent=5 // pred_check
        %p221 = pneg %p220
      $region30: #{tpu_custom_call.1} parent=5 // pred_check_branch
        %223 = sbr.rel (%p221) target = $region32
      $region31: #{tpu_custom_call.1} parent=5 // pred_region
        // Predicated region
        $region33: #{tpu_custom_call.1} parent=31 // pred_check
          %p224 = pneg %p47
        $region34: #{tpu_custom_call.1} parent=31 // pred_check_branch
          %226 = sbr.rel (%p224) target = $region36
        $region35: #{tpu_custom_call.1} parent=31 // pred_region
          %s227 = smul.u32 32, %s23
          %p228 = scmp.lt.s32.totalorder %s227, 63
          %s229 = scalar_select %p228, %s227, 63
          %s230 = smul.addr %s229, 8
          %s231 = scalar_lea.vmem %s0, %s230
          %s232 = smul.u32 32, %s23
        $region36: #{tpu_custom_call.1} parent=31 // pred_fallthru
          _
      $region32: #{tpu_custom_call.1} parent=5 // pred_fallthru
        _
      %p233 = scmp.le.s32.totalorder 1, %s15
      %p234 = scmp.lt.s32.totalorder %s15, 3
      %p235 = pnand %p233, %p234
      %p236 = pneg %p235
      // Predicated region
      $region37: #{tpu_custom_call.1} parent=5 // pred_check
        _
      $region38: #{tpu_custom_call.1} parent=5 // pred_check_branch
        %238 = sbr.rel (%p235) target = $region40
      $region39: #{tpu_custom_call.1} parent=5 // pred_region
        %s239 = ssub.s32 %s15, 1
        // Predicated region
        $region41: #{tpu_custom_call.1} parent=39 // pred_check
          %p240 = pneg %p121
        $region42: #{tpu_custom_call.1} parent=39 // pred_check_branch
          %242 = sbr.rel (%p240) target = $region44
        $region43: #{tpu_custom_call.1} parent=39 // pred_region
          %243 = dma.done [#allocation3], 12288
        $region44: #{tpu_custom_call.1} parent=39 // pred_fallthru
          _
        %s244 = smul.u32 32, %s25
        %p245 = scmp.lt.s32.totalorder %s244, 63
        %s246 = scalar_select %p245, %s244, 63
        %s247 = smul.addr %s246, 8
        %s248 = scalar_lea.vmem %s0, %s247
        %p249 = pneg %p53
        %p250 = pneg %p50
        %p251 = pneg %p74
        %p252 = pneg %p71
        %p253 = pneg %p95
        %p254 = pneg %p92
        %p255 = pneg %p121
        %p256 = pneg %p118
        %s257 = smul.u32 3, %s24
        %p258 = scmp.lt.s32.totalorder %s257, 2
        %s259 = scalar_select %p258, %s257, 2
        %s260 = scalar_lea.vmem %s4, %s259
        %p261 = pneg %p147
        %p262 = pneg %p144
        %p263 = pneg %p175
        %p264 = pneg %p172
        %s265 = sand.u32 %s162, 1
        %s266 = scalar_lea.sflag [#allocation4], %s265
        %s267 = sand.u32 %s162, 1
        %s268 = smul.addr %s267, 768
        %s269 = scalar_lea.vmem [#allocation5], %s268
        %s270 = smul.u32 32, %s25
        %p271 = scmp.lt.s32.totalorder %s270, 63
        %s272 = scalar_select %p271, %s270, 63
        %s273 = smul.addr %s272, 8
        %s274 = scalar_lea.vmem %s0, %s273
        %s275 = smul.u32 32, %s25
        %s276 = smul.u32 3, %s24
        %s277 = smul.u32 3, %s24
        %p278 = scmp.lt.s32.totalorder %s277, 2
        %s279 = scalar_select %p278, %s277, 2
        %s280 = scalar_lea.vmem %s4, %s279
        %s281 = smul.u32 3, %s24
        %s282 = smul.u32 32, %s25
        %s283 = smul.u32 3, %s24
        %v284 = vld [vmem:[%s274] sm:$0xff]
        %v285 = vld [vmem:[%s274 + $0x8] sm:$0xff]
        %v286 = vld [vmem:[%s274 + $0x10] sm:$0xff]
        %v287 = vld [vmem:[%s274 + $0x18] sm:$0xff]
        %v288 = vld [vmem:[%s274 + $0x20] sm:$0xff]
        %v289 = vld [vmem:[%s274 + $0x28] sm:$0xff]
        %v290 = vld [vmem:[%s274 + $0x30] sm:$0xff]
        %v291 = vld [vmem:[%s274 + $0x38] sm:$0xff]
        %v292 = vld [vmem:[%s274 + $0x40] sm:$0xff]
        %v293 = vld [vmem:[%s274 + $0x48] sm:$0xff]
        %v294 = vld [vmem:[%s274 + $0x50] sm:$0xff]
        %v295 = vld [vmem:[%s274 + $0x58] sm:$0xff]
        %v296 = vld [vmem:[%s274 + $0x60] sm:$0xff]
        %v297 = vld [vmem:[%s274 + $0x68] sm:$0xff]
        %v298 = vld [vmem:[%s274 + $0x70] sm:$0xff]
        %v299 = vld [vmem:[%s274 + $0x78] sm:$0xff]
        %v300 = vld [vmem:[%s274 + $0x80] sm:$0xff]
        %v301 = vld [vmem:[%s274 + $0x88] sm:$0xff]
        %v302 = vld [vmem:[%s274 + $0x90] sm:$0xff]
        %v303 = vld [vmem:[%s274 + $0x98] sm:$0xff]
        %v304 = vld [vmem:[%s274 + $0xa0] sm:$0xff]
        %v305 = vld [vmem:[%s274 + $0xa8] sm:$0xff]
        %v306 = vld [vmem:[%s274 + $0xb0] sm:$0xff]
        %v307 = vld [vmem:[%s274 + $0xb8] sm:$0xff]
        %v308 = vld [vmem:[%s274 + $0xc0] sm:$0xff]
        %v309 = vld [vmem:[%s274 + $0xc8] sm:$0xff]
        %v310 = vld [vmem:[%s274 + $0xd0] sm:$0xff]
        %v311 = vld [vmem:[%s274 + $0xd8] sm:$0xff]
        %v312 = vld [vmem:[%s274 + $0xe0] sm:$0xff]
        %v313 = vld [vmem:[%s274 + $0xe8] sm:$0xff]
        %v314 = vld [vmem:[%s274 + $0xf0] sm:$0xff]
        %v315 = vld [vmem:[%s274 + $0xf8] sm:$0xff]
        %v316 = vld [vmem:[%s1] sm:$0x77]
        %318 = vset.pattern.permute.xlu0 0
        %319 = vperm.xlu0 %318, %v284
        %v320 = vpop.permute.xlu0 %319
        %323 = vset.pattern.permute.xlu0 0
        %324 = vperm.xlu0 %323, %v285
        %v325 = vpop.permute.xlu0 %324
        %328 = vset.pattern.permute.xlu0 0
        %329 = vperm.xlu0 %328, %v286
        %v330 = vpop.permute.xlu0 %329
        %333 = vset.pattern.permute.xlu0 0
        %334 = vperm.xlu0 %333, %v287
        %v335 = vpop.permute.xlu0 %334
        %338 = vset.pattern.permute.xlu0 0
        %339 = vperm.xlu0 %338, %v288
        %v340 = vpop.permute.xlu0 %339
        %343 = vset.pattern.permute.xlu0 0
        %344 = vperm.xlu0 %343, %v289
        %v345 = vpop.permute.xlu0 %344
        %348 = vset.pattern.permute.xlu0 0
        %349 = vperm.xlu0 %348, %v290
        %v350 = vpop.permute.xlu0 %349
        %353 = vset.pattern.permute.xlu0 0
        %354 = vperm.xlu0 %353, %v291
        %v355 = vpop.permute.xlu0 %354
        %358 = vset.pattern.permute.xlu0 0
        %359 = vperm.xlu0 %358, %v292
        %v360 = vpop.permute.xlu0 %359
        %363 = vset.pattern.permute.xlu0 0
        %364 = vperm.xlu0 %363, %v293
        %v365 = vpop.permute.xlu0 %364
        %368 = vset.pattern.permute.xlu0 0
        %369 = vperm.xlu0 %368, %v294
        %v370 = vpop.permute.xlu0 %369
        %373 = vset.pattern.permute.xlu0 0
        %374 = vperm.xlu0 %373, %v295
        %v375 = vpop.permute.xlu0 %374
        %378 = vset.pattern.permute.xlu0 0
        %379 = vperm.xlu0 %378, %v296
        %v380 = vpop.permute.xlu0 %379
        %383 = vset.pattern.permute.xlu0 0
        %384 = vperm.xlu0 %383, %v297
        %v385 = vpop.permute.xlu0 %384
        %388 = vset.pattern.permute.xlu0 0
        %389 = vperm.xlu0 %388, %v298
        %v390 = vpop.permute.xlu0 %389
        %393 = vset.pattern.permute.xlu0 0
        %394 = vperm.xlu0 %393, %v299
        %v395 = vpop.permute.xlu0 %394
        %398 = vset.pattern.permute.xlu0 0
        %399 = vperm.xlu0 %398, %v300
        %v400 = vpop.permute.xlu0 %399
        %403 = vset.pattern.permute.xlu0 0
        %404 = vperm.xlu0 %403, %v301
        %v405 = vpop.permute.xlu0 %404
        %408 = vset.pattern.permute.xlu0 0
        %409 = vperm.xlu0 %408, %v302
        %v410 = vpop.permute.xlu0 %409
        %413 = vset.pattern.permute.xlu0 0
        %414 = vperm.xlu0 %413, %v303
        %v415 = vpop.permute.xlu0 %414
        %418 = vset.pattern.permute.xlu0 0
        %419 = vperm.xlu0 %418, %v304
        %v420 = vpop.permute.xlu0 %419
        %423 = vset.pattern.permute.xlu0 0
        %424 = vperm.xlu0 %423, %v305
        %v425 = vpop.permute.xlu0 %424
        %428 = vset.pattern.permute.xlu0 0
        %429 = vperm.xlu0 %428, %v306
        %v430 = vpop.permute.xlu0 %429
        %433 = vset.pattern.permute.xlu0 0
        %434 = vperm.xlu0 %433, %v307
        %v435 = vpop.permute.xlu0 %434
        %438 = vset.pattern.permute.xlu0 0
        %439 = vperm.xlu0 %438, %v308
        %v440 = vpop.permute.xlu0 %439
        %443 = vset.pattern.permute.xlu0 0
        %444 = vperm.xlu0 %443, %v309
        %v445 = vpop.permute.xlu0 %444
        %448 = vset.pattern.permute.xlu0 0
        %449 = vperm.xlu0 %448, %v310
        %v450 = vpop.permute.xlu0 %449
        %453 = vset.pattern.permute.xlu0 0
        %454 = vperm.xlu0 %453, %v311
        %v455 = vpop.permute.xlu0 %454
        %458 = vset.pattern.permute.xlu0 0
        %459 = vperm.xlu0 %458, %v312
        %v460 = vpop.permute.xlu0 %459
        %463 = vset.pattern.permute.xlu0 0
        %464 = vperm.xlu0 %463, %v313
        %v465 = vpop.permute.xlu0 %464
        %468 = vset.pattern.permute.xlu0 0
        %469 = vperm.xlu0 %468, %v314
        %v470 = vpop.permute.xlu0 %469
        %473 = vset.pattern.permute.xlu0 0
        %474 = vperm.xlu0 %473, %v315
        %v475 = vpop.permute.xlu0 %474
        %v478 = vlaneseq
        %v479 = vshrl.u32 %v478, 7
        %v480 = vsub.s32 0, %v479
        %v481 = vrot.slane %v316, %v480
        %v482 = vlaneseq
        %v483 = vshrl.u32 %v482, 7
        %v484 = vsub.s32 4, %v483
        %v485 = vrot.slane %v316, %v484
        %v488 = vlaneseq
        %v489 = vshrl.u32 %v488, 7
        %v490 = vsub.s32 0, %v489
        %v491 = vrot.slane %v481, %v490
        %v492 = vlaneseq
        %v493 = vshrl.u32 %v492, 7
        %v494 = vsub.s32 0, %v493
        %v495 = vrot.slane %v485, %v494
        %v496 = vmul.f32 %v320, %v491
        %v497 = vmul.f32 %v320, %v495
        %v498 = vmul.f32 %v325, %v491
        %v499 = vmul.f32 %v325, %v495
        %v500 = vmul.f32 %v330, %v491
        %v501 = vmul.f32 %v330, %v495
        %v502 = vmul.f32 %v335, %v491
        %v503 = vmul.f32 %v335, %v495
        %v504 = vmul.f32 %v340, %v491
        %v505 = vmul.f32 %v340, %v495
        %v506 = vmul.f32 %v345, %v491
        %v507 = vmul.f32 %v345, %v495
        %v508 = vmul.f32 %v350, %v491
        %v509 = vmul.f32 %v350, %v495
        %v510 = vmul.f32 %v355, %v491
        %v511 = vmul.f32 %v355, %v495
        %v512 = vmul.f32 %v360, %v491
        %v513 = vmul.f32 %v360, %v495
        %v514 = vmul.f32 %v365, %v491
        %v515 = vmul.f32 %v365, %v495
        %v516 = vmul.f32 %v370, %v491
        %v517 = vmul.f32 %v370, %v495
        %v518 = vmul.f32 %v375, %v491
        %v519 = vmul.f32 %v375, %v495
        %v520 = vmul.f32 %v380, %v491
        %v521 = vmul.f32 %v380, %v495
        %v522 = vmul.f32 %v385, %v491
        %v523 = vmul.f32 %v385, %v495
        %v524 = vmul.f32 %v390, %v491
        %v525 = vmul.f32 %v390, %v495
        %v526 = vmul.f32 %v395, %v491
        %v527 = vmul.f32 %v395, %v495
        %v528 = vmul.f32 %v400, %v491
        %v529 = vmul.f32 %v400, %v495
        %v530 = vmul.f32 %v405, %v491
        %v531 = vmul.f32 %v405, %v495
        %v532 = vmul.f32 %v410, %v491
        %v533 = vmul.f32 %v410, %v495
        %v534 = vmul.f32 %v415, %v491
        %v535 = vmul.f32 %v415, %v495
        %v536 = vmul.f32 %v420, %v491
        %v537 = vmul.f32 %v420, %v495
        %v538 = vmul.f32 %v425, %v491
        %v539 = vmul.f32 %v425, %v495
        %v540 = vmul.f32 %v430, %v491
        %v541 = vmul.f32 %v430, %v495
        %v542 = vmul.f32 %v435, %v491
        %v543 = vmul.f32 %v435, %v495
        %v544 = vmul.f32 %v440, %v491
        %v545 = vmul.f32 %v440, %v495
        %v546 = vmul.f32 %v445, %v491
        %v547 = vmul.f32 %v445, %v495
        %v548 = vmul.f32 %v450, %v491
        %v549 = vmul.f32 %v450, %v495
        %v550 = vmul.f32 %v455, %v491
        %v551 = vmul.f32 %v455, %v495
        %v552 = vmul.f32 %v460, %v491
        %v553 = vmul.f32 %v460, %v495
        %v554 = vmul.f32 %v465, %v491
        %v555 = vmul.f32 %v465, %v495
        %v556 = vmul.f32 %v470, %v491
        %v557 = vmul.f32 %v470, %v495
        %v558 = vmul.f32 %v475, %v491
        %v559 = vmul.f32 %v475, %v495
        %560 = vset.pattern.permute.xlu0 1
        %561 = vperm.xlu0 %560, %v284
        %v562 = vpop.permute.xlu0 %561
        %564 = vset.pattern.permute.xlu0 1
        %565 = vperm.xlu0 %564, %v285
        %v566 = vpop.permute.xlu0 %565
        %568 = vset.pattern.permute.xlu0 1
        %569 = vperm.xlu0 %568, %v286
        %v570 = vpop.permute.xlu0 %569
        %572 = vset.pattern.permute.xlu0 1
        %573 = vperm.xlu0 %572, %v287
        %v574 = vpop.permute.xlu0 %573
        %576 = vset.pattern.permute.xlu0 1
        %577 = vperm.xlu0 %576, %v288
        %v578 = vpop.permute.xlu0 %577
        %580 = vset.pattern.permute.xlu0 1
        %581 = vperm.xlu0 %580, %v289
        %v582 = vpop.permute.xlu0 %581
        %584 = vset.pattern.permute.xlu0 1
        %585 = vperm.xlu0 %584, %v290
        %v586 = vpop.permute.xlu0 %585
        %588 = vset.pattern.permute.xlu0 1
        %589 = vperm.xlu0 %588, %v291
        %v590 = vpop.permute.xlu0 %589
        %592 = vset.pattern.permute.xlu0 1
        %593 = vperm.xlu0 %592, %v292
        %v594 = vpop.permute.xlu0 %593
        %596 = vset.pattern.permute.xlu0 1
        %597 = vperm.xlu0 %596, %v293
        %v598 = vpop.permute.xlu0 %597
        %600 = vset.pattern.permute.xlu0 1
        %601 = vperm.xlu0 %600, %v294
        %v602 = vpop.permute.xlu0 %601
        %604 = vset.pattern.permute.xlu0 1
        %605 = vperm.xlu0 %604, %v295
        %v606 = vpop.permute.xlu0 %605
        %608 = vset.pattern.permute.xlu0 1
        %609 = vperm.xlu0 %608, %v296
        %v610 = vpop.permute.xlu0 %609
        %612 = vset.pattern.permute.xlu0 1
        %613 = vperm.xlu0 %612, %v297
        %v614 = vpop.permute.xlu0 %613
        %616 = vset.pattern.permute.xlu0 1
        %617 = vperm.xlu0 %616, %v298
        %v618 = vpop.permute.xlu0 %617
        %620 = vset.pattern.permute.xlu0 1
        %621 = vperm.xlu0 %620, %v299
        %v622 = vpop.permute.xlu0 %621
        %624 = vset.pattern.permute.xlu0 1
        %625 = vperm.xlu0 %624, %v300
        %v626 = vpop.permute.xlu0 %625
        %628 = vset.pattern.permute.xlu0 1
        %629 = vperm.xlu0 %628, %v301
        %v630 = vpop.permute.xlu0 %629
        %632 = vset.pattern.permute.xlu0 1
        %633 = vperm.xlu0 %632, %v302
        %v634 = vpop.permute.xlu0 %633
        %636 = vset.pattern.permute.xlu0 1
        %637 = vperm.xlu0 %636, %v303
        %v638 = vpop.permute.xlu0 %637
        %640 = vset.pattern.permute.xlu0 1
        %641 = vperm.xlu0 %640, %v304
        %v642 = vpop.permute.xlu0 %641
        %644 = vset.pattern.permute.xlu0 1
        %645 = vperm.xlu0 %644, %v305
        %v646 = vpop.permute.xlu0 %645
        %648 = vset.pattern.permute.xlu0 1
        %649 = vperm.xlu0 %648, %v306
        %v650 = vpop.permute.xlu0 %649
        %652 = vset.pattern.permute.xlu0 1
        %653 = vperm.xlu0 %652, %v307
        %v654 = vpop.permute.xlu0 %653
        %656 = vset.pattern.permute.xlu0 1
        %657 = vperm.xlu0 %656, %v308
        %v658 = vpop.permute.xlu0 %657
        %660 = vset.pattern.permute.xlu0 1
        %661 = vperm.xlu0 %660, %v309
        %v662 = vpop.permute.xlu0 %661
        %664 = vset.pattern.permute.xlu0 1
        %665 = vperm.xlu0 %664, %v310
        %v666 = vpop.permute.xlu0 %665
        %668 = vset.pattern.permute.xlu0 1
        %669 = vperm.xlu0 %668, %v311
        %v670 = vpop.permute.xlu0 %669
        %672 = vset.pattern.permute.xlu0 1
        %673 = vperm.xlu0 %672, %v312
        %v674 = vpop.permute.xlu0 %673
        %676 = vset.pattern.permute.xlu0 1
        %677 = vperm.xlu0 %676, %v313
        %v678 = vpop.permute.xlu0 %677
        %680 = vset.pattern.permute.xlu0 1
        %681 = vperm.xlu0 %680, %v314
        %v682 = vpop.permute.xlu0 %681
        %684 = vset.pattern.permute.xlu0 1
        %685 = vperm.xlu0 %684, %v315
        %v686 = vpop.permute.xlu0 %685
        %v688 = vlaneseq
        %v689 = vshrl.u32 %v688, 7
        %v690 = vsub.s32 1, %v689
        %v691 = vrot.slane %v316, %v690
        %v692 = vlaneseq
        %v693 = vshrl.u32 %v692, 7
        %v694 = vsub.s32 5, %v693
        %v695 = vrot.slane %v316, %v694
        %v698 = vlaneseq
        %v699 = vshrl.u32 %v698, 7
        %v700 = vsub.s32 1, %v699
        %v701 = vrot.slane %v691, %v700
        %v702 = vlaneseq
        %v703 = vshrl.u32 %v702, 7
        %v704 = vsub.s32 1, %v703
        %v705 = vrot.slane %v695, %v704
        %v706 = vmul.f32 %v562, %v701
        %v707 = vmul.f32 %v562, %v705
        %v708 = vmul.f32 %v566, %v701
        %v709 = vmul.f32 %v566, %v705
        %v710 = vmul.f32 %v570, %v701
        %v711 = vmul.f32 %v570, %v705
        %v712 = vmul.f32 %v574, %v701
        %v713 = vmul.f32 %v574, %v705
        %v714 = vmul.f32 %v578, %v701
        %v715 = vmul.f32 %v578, %v705
        %v716 = vmul.f32 %v582, %v701
        %v717 = vmul.f32 %v582, %v705
        %v718 = vmul.f32 %v586, %v701
        %v719 = vmul.f32 %v586, %v705
        %v720 = vmul.f32 %v590, %v701
        %v721 = vmul.f32 %v590, %v705
        %v722 = vmul.f32 %v594, %v701
        %v723 = vmul.f32 %v594, %v705
        %v724 = vmul.f32 %v598, %v701
        %v725 = vmul.f32 %v598, %v705
        %v726 = vmul.f32 %v602, %v701
        %v727 = vmul.f32 %v602, %v705
        %v728 = vmul.f32 %v606, %v701
        %v729 = vmul.f32 %v606, %v705
        %v730 = vmul.f32 %v610, %v701
        %v731 = vmul.f32 %v610, %v705
        %v732 = vmul.f32 %v614, %v701
        %v733 = vmul.f32 %v614, %v705
        %v734 = vmul.f32 %v618, %v701
        %v735 = vmul.f32 %v618, %v705
        %v736 = vmul.f32 %v622, %v701
        %v737 = vmul.f32 %v622, %v705
        %v738 = vmul.f32 %v626, %v701
        %v739 = vmul.f32 %v626, %v705
        %v740 = vmul.f32 %v630, %v701
        %v741 = vmul.f32 %v630, %v705
        %v742 = vmul.f32 %v634, %v701
        %v743 = vmul.f32 %v634, %v705
        %v744 = vmul.f32 %v638, %v701
        %v745 = vmul.f32 %v638, %v705
        %v746 = vmul.f32 %v642, %v701
        %v747 = vmul.f32 %v642, %v705
        %v748 = vmul.f32 %v646, %v701
        %v749 = vmul.f32 %v646, %v705
        %v750 = vmul.f32 %v650, %v701
        %v751 = vmul.f32 %v650, %v705
        %v752 = vmul.f32 %v654, %v701
        %v753 = vmul.f32 %v654, %v705
        %v754 = vmul.f32 %v658, %v701
        %v755 = vmul.f32 %v658, %v705
        %v756 = vmul.f32 %v662, %v701
        %v757 = vmul.f32 %v662, %v705
        %v758 = vmul.f32 %v666, %v701
        %v759 = vmul.f32 %v666, %v705
        %v760 = vmul.f32 %v670, %v701
        %v761 = vmul.f32 %v670, %v705
        %v762 = vmul.f32 %v674, %v701
        %v763 = vmul.f32 %v674, %v705
        %v764 = vmul.f32 %v678, %v701
        %v765 = vmul.f32 %v678, %v705
        %v766 = vmul.f32 %v682, %v701
        %v767 = vmul.f32 %v682, %v705
        %v768 = vmul.f32 %v686, %v701
        %v769 = vmul.f32 %v686, %v705
        %v770 = vadd.f32 %v496, %v706
        %v771 = vadd.f32 %v497, %v707
        %v772 = vadd.f32 %v498, %v708
        %v773 = vadd.f32 %v499, %v709
        %v774 = vadd.f32 %v500, %v710
        %v775 = vadd.f32 %v501, %v711
        %v776 = vadd.f32 %v502, %v712
        %v777 = vadd.f32 %v503, %v713
        %v778 = vadd.f32 %v504, %v714
        %v779 = vadd.f32 %v505, %v715
        %v780 = vadd.f32 %v506, %v716
        %v781 = vadd.f32 %v507, %v717
        %v782 = vadd.f32 %v508, %v718
        %v783 = vadd.f32 %v509, %v719
        %v784 = vadd.f32 %v510, %v720
        %v785 = vadd.f32 %v511, %v721
        %v786 = vadd.f32 %v512, %v722
        %v787 = vadd.f32 %v513, %v723
        %v788 = vadd.f32 %v514, %v724
        %v789 = vadd.f32 %v515, %v725
        %v790 = vadd.f32 %v516, %v726
        %v791 = vadd.f32 %v517, %v727
        %v792 = vadd.f32 %v518, %v728
        %v793 = vadd.f32 %v519, %v729
        %v794 = vadd.f32 %v520, %v730
        %v795 = vadd.f32 %v521, %v731
        %v796 = vadd.f32 %v522, %v732
        %v797 = vadd.f32 %v523, %v733
        %v798 = vadd.f32 %v524, %v734
        %v799 = vadd.f32 %v525, %v735
        %v800 = vadd.f32 %v526, %v736
        %v801 = vadd.f32 %v527, %v737
        %v802 = vadd.f32 %v528, %v738
        %v803 = vadd.f32 %v529, %v739
        %v804 = vadd.f32 %v530, %v740
        %v805 = vadd.f32 %v531, %v741
        %v806 = vadd.f32 %v532, %v742
        %v807 = vadd.f32 %v533, %v743
        %v808 = vadd.f32 %v534, %v744
        %v809 = vadd.f32 %v535, %v745
        %v810 = vadd.f32 %v536, %v746
        %v811 = vadd.f32 %v537, %v747
        %v812 = vadd.f32 %v538, %v748
        %v813 = vadd.f32 %v539, %v749
        %v814 = vadd.f32 %v540, %v750
        %v815 = vadd.f32 %v541, %v751
        %v816 = vadd.f32 %v542, %v752
        %v817 = vadd.f32 %v543, %v753
        %v818 = vadd.f32 %v544, %v754
        %v819 = vadd.f32 %v545, %v755
        %v820 = vadd.f32 %v546, %v756
        %v821 = vadd.f32 %v547, %v757
        %v822 = vadd.f32 %v548, %v758
        %v823 = vadd.f32 %v549, %v759
        %v824 = vadd.f32 %v550, %v760
        %v825 = vadd.f32 %v551, %v761
        %v826 = vadd.f32 %v552, %v762
        %v827 = vadd.f32 %v553, %v763
        %v828 = vadd.f32 %v554, %v764
        %v829 = vadd.f32 %v555, %v765
        %v830 = vadd.f32 %v556, %v766
        %v831 = vadd.f32 %v557, %v767
        %v832 = vadd.f32 %v558, %v768
        %v833 = vadd.f32 %v559, %v769
        %834 = vset.pattern.permute.xlu0 2
        %835 = vperm.xlu0 %834, %v284
        %v836 = vpop.permute.xlu0 %835
        %838 = vset.pattern.permute.xlu0 2
        %839 = vperm.xlu0 %838, %v285
        %v840 = vpop.permute.xlu0 %839
        %842 = vset.pattern.permute.xlu0 2
        %843 = vperm.xlu0 %842, %v286
        %v844 = vpop.permute.xlu0 %843
        %846 = vset.pattern.permute.xlu0 2
        %847 = vperm.xlu0 %846, %v287
        %v848 = vpop.permute.xlu0 %847
        %850 = vset.pattern.permute.xlu0 2
        %851 = vperm.xlu0 %850, %v288
        %v852 = vpop.permute.xlu0 %851
        %854 = vset.pattern.permute.xlu0 2
        %855 = vperm.xlu0 %854, %v289
        %v856 = vpop.permute.xlu0 %855
        %858 = vset.pattern.permute.xlu0 2
        %859 = vperm.xlu0 %858, %v290
        %v860 = vpop.permute.xlu0 %859
        %862 = vset.pattern.permute.xlu0 2
        %863 = vperm.xlu0 %862, %v291
        %v864 = vpop.permute.xlu0 %863
        %866 = vset.pattern.permute.xlu0 2
        %867 = vperm.xlu0 %866, %v292
        %v868 = vpop.permute.xlu0 %867
        %870 = vset.pattern.permute.xlu0 2
        %871 = vperm.xlu0 %870, %v293
        %v872 = vpop.permute.xlu0 %871
        %874 = vset.pattern.permute.xlu0 2
        %875 = vperm.xlu0 %874, %v294
        %v876 = vpop.permute.xlu0 %875
        %878 = vset.pattern.permute.xlu0 2
        %879 = vperm.xlu0 %878, %v295
        %v880 = vpop.permute.xlu0 %879
        %882 = vset.pattern.permute.xlu0 2
        %883 = vperm.xlu0 %882, %v296
        %v884 = vpop.permute.xlu0 %883
        %886 = vset.pattern.permute.xlu0 2
        %887 = vperm.xlu0 %886, %v297
        %v888 = vpop.permute.xlu0 %887
        %890 = vset.pattern.permute.xlu0 2
        %891 = vperm.xlu0 %890, %v298
        %v892 = vpop.permute.xlu0 %891
        %894 = vset.pattern.permute.xlu0 2
        %895 = vperm.xlu0 %894, %v299
        %v896 = vpop.permute.xlu0 %895
        %898 = vset.pattern.permute.xlu0 2
        %899 = vperm.xlu0 %898, %v300
        %v900 = vpop.permute.xlu0 %899
        %902 = vset.pattern.permute.xlu0 2
        %903 = vperm.xlu0 %902, %v301
        %v904 = vpop.permute.xlu0 %903
        %906 = vset.pattern.permute.xlu0 2
        %907 = vperm.xlu0 %906, %v302
        %v908 = vpop.permute.xlu0 %907
        %910 = vset.pattern.permute.xlu0 2
        %911 = vperm.xlu0 %910, %v303
        %v912 = vpop.permute.xlu0 %911
        %914 = vset.pattern.permute.xlu0 2
        %915 = vperm.xlu0 %914, %v304
        %v916 = vpop.permute.xlu0 %915
        %918 = vset.pattern.permute.xlu0 2
        %919 = vperm.xlu0 %918, %v305
        %v920 = vpop.permute.xlu0 %919
        %922 = vset.pattern.permute.xlu0 2
        %923 = vperm.xlu0 %922, %v306
        %v924 = vpop.permute.xlu0 %923
        %926 = vset.pattern.permute.xlu0 2
        %927 = vperm.xlu0 %926, %v307
        %v928 = vpop.permute.xlu0 %927
        %930 = vset.pattern.permute.xlu0 2
        %931 = vperm.xlu0 %930, %v308
        %v932 = vpop.permute.xlu0 %931
        %934 = vset.pattern.permute.xlu0 2
        %935 = vperm.xlu0 %934, %v309
        %v936 = vpop.permute.xlu0 %935
        %938 = vset.pattern.permute.xlu0 2
        %939 = vperm.xlu0 %938, %v310
        %v940 = vpop.permute.xlu0 %939
        %942 = vset.pattern.permute.xlu0 2
        %943 = vperm.xlu0 %942, %v311
        %v944 = vpop.permute.xlu0 %943
        %946 = vset.pattern.permute.xlu0 2
        %947 = vperm.xlu0 %946, %v312
        %v948 = vpop.permute.xlu0 %947
        %950 = vset.pattern.permute.xlu0 2
        %951 = vperm.xlu0 %950, %v313
        %v952 = vpop.permute.xlu0 %951
        %954 = vset.pattern.permute.xlu0 2
        %955 = vperm.xlu0 %954, %v314
        %v956 = vpop.permute.xlu0 %955
        %958 = vset.pattern.permute.xlu0 2
        %959 = vperm.xlu0 %958, %v315
        %v960 = vpop.permute.xlu0 %959
        %v962 = vlaneseq
        %v963 = vshrl.u32 %v962, 7
        %v964 = vsub.s32 2, %v963
        %v965 = vrot.slane %v316, %v964
        %v966 = vlaneseq
        %v967 = vshrl.u32 %v966, 7
        %v968 = vsub.s32 6, %v967
        %v969 = vrot.slane %v316, %v968
        %v972 = vlaneseq
        %v973 = vshrl.u32 %v972, 7
        %v974 = vsub.s32 2, %v973
        %v975 = vrot.slane %v965, %v974
        %v976 = vlaneseq
        %v977 = vshrl.u32 %v976, 7
        %v978 = vsub.s32 2, %v977
        %v979 = vrot.slane %v969, %v978
        %v980 = vmul.f32 %v836, %v975
        %v981 = vmul.f32 %v836, %v979
        %v982 = vmul.f32 %v840, %v975
        %v983 = vmul.f32 %v840, %v979
        %v984 = vmul.f32 %v844, %v975
        %v985 = vmul.f32 %v844, %v979
        %v986 = vmul.f32 %v848, %v975
        %v987 = vmul.f32 %v848, %v979
        %v988 = vmul.f32 %v852, %v975
        %v989 = vmul.f32 %v852, %v979
        %v990 = vmul.f32 %v856, %v975
        %v991 = vmul.f32 %v856, %v979
        %v992 = vmul.f32 %v860, %v975
        %v993 = vmul.f32 %v860, %v979
        %v994 = vmul.f32 %v864, %v975
        %v995 = vmul.f32 %v864, %v979
        %v996 = vmul.f32 %v868, %v975
        %v997 = vmul.f32 %v868, %v979
        %v998 = vmul.f32 %v872, %v975
        %v999 = vmul.f32 %v872, %v979
        %v1000 = vmul.f32 %v876, %v975
        %v1001 = vmul.f32 %v876, %v979
        %v1002 = vmul.f32 %v880, %v975
        %v1003 = vmul.f32 %v880, %v979
        %v1004 = vmul.f32 %v884, %v975
        %v1005 = vmul.f32 %v884, %v979
        %v1006 = vmul.f32 %v888, %v975
        %v1007 = vmul.f32 %v888, %v979
        %v1008 = vmul.f32 %v892, %v975
        %v1009 = vmul.f32 %v892, %v979
        %v1010 = vmul.f32 %v896, %v975
        %v1011 = vmul.f32 %v896, %v979
        %v1012 = vmul.f32 %v900, %v975
        %v1013 = vmul.f32 %v900, %v979
        %v1014 = vmul.f32 %v904, %v975
        %v1015 = vmul.f32 %v904, %v979
        %v1016 = vmul.f32 %v908, %v975
        %v1017 = vmul.f32 %v908, %v979
        %v1018 = vmul.f32 %v912, %v975
        %v1019 = vmul.f32 %v912, %v979
        %v1020 = vmul.f32 %v916, %v975
        %v1021 = vmul.f32 %v916, %v979
        %v1022 = vmul.f32 %v920, %v975
        %v1023 = vmul.f32 %v920, %v979
        %v1024 = vmul.f32 %v924, %v975
        %v1025 = vmul.f32 %v924, %v979
        %v1026 = vmul.f32 %v928, %v975
        %v1027 = vmul.f32 %v928, %v979
        %v1028 = vmul.f32 %v932, %v975
        %v1029 = vmul.f32 %v932, %v979
        %v1030 = vmul.f32 %v936, %v975
        %v1031 = vmul.f32 %v936, %v979
        %v1032 = vmul.f32 %v940, %v975
        %v1033 = vmul.f32 %v940, %v979
        %v1034 = vmul.f32 %v944, %v975
        %v1035 = vmul.f32 %v944, %v979
        %v1036 = vmul.f32 %v948, %v975
        %v1037 = vmul.f32 %v948, %v979
        %v1038 = vmul.f32 %v952, %v975
        %v1039 = vmul.f32 %v952, %v979
        %v1040 = vmul.f32 %v956, %v975
        %v1041 = vmul.f32 %v956, %v979
        %v1042 = vmul.f32 %v960, %v975
        %v1043 = vmul.f32 %v960, %v979
        %v1044 = vadd.f32 %v770, %v980
        %v1045 = vadd.f32 %v771, %v981
        %v1046 = vadd.f32 %v772, %v982
        %v1047 = vadd.f32 %v773, %v983
        %v1048 = vadd.f32 %v774, %v984
        %v1049 = vadd.f32 %v775, %v985
        %v1050 = vadd.f32 %v776, %v986
        %v1051 = vadd.f32 %v777, %v987
        %v1052 = vadd.f32 %v778, %v988
        %v1053 = vadd.f32 %v779, %v989
        %v1054 = vadd.f32 %v780, %v990
        %v1055 = vadd.f32 %v781, %v991
        %v1056 = vadd.f32 %v782, %v992
        %v1057 = vadd.f32 %v783, %v993
        %v1058 = vadd.f32 %v784, %v994
        %v1059 = vadd.f32 %v785, %v995
        %v1060 = vadd.f32 %v786, %v996
        %v1061 = vadd.f32 %v787, %v997
        %v1062 = vadd.f32 %v788, %v998
        %v1063 = vadd.f32 %v789, %v999
        %v1064 = vadd.f32 %v790, %v1000
        %v1065 = vadd.f32 %v791, %v1001
        %v1066 = vadd.f32 %v792, %v1002
        %v1067 = vadd.f32 %v793, %v1003
        %v1068 = vadd.f32 %v794, %v1004
        %v1069 = vadd.f32 %v795, %v1005
        %v1070 = vadd.f32 %v796, %v1006
        %v1071 = vadd.f32 %v797, %v1007
        %v1072 = vadd.f32 %v798, %v1008
        %v1073 = vadd.f32 %v799, %v1009
        %v1074 = vadd.f32 %v800, %v1010
        %v1075 = vadd.f32 %v801, %v1011
        %v1076 = vadd.f32 %v802, %v1012
        %v1077 = vadd.f32 %v803, %v1013
        %v1078 = vadd.f32 %v804, %v1014
        %v1079 = vadd.f32 %v805, %v1015
        %v1080 = vadd.f32 %v806, %v1016
        %v1081 = vadd.f32 %v807, %v1017
        %v1082 = vadd.f32 %v808, %v1018
        %v1083 = vadd.f32 %v809, %v1019
        %v1084 = vadd.f32 %v810, %v1020
        %v1085 = vadd.f32 %v811, %v1021
        %v1086 = vadd.f32 %v812, %v1022
        %v1087 = vadd.f32 %v813, %v1023
        %v1088 = vadd.f32 %v814, %v1024
        %v1089 = vadd.f32 %v815, %v1025
        %v1090 = vadd.f32 %v816, %v1026
        %v1091 = vadd.f32 %v817, %v1027
        %v1092 = vadd.f32 %v818, %v1028
        %v1093 = vadd.f32 %v819, %v1029
        %v1094 = vadd.f32 %v820, %v1030
        %v1095 = vadd.f32 %v821, %v1031
        %v1096 = vadd.f32 %v822, %v1032
        %v1097 = vadd.f32 %v823, %v1033
        %v1098 = vadd.f32 %v824, %v1034
        %v1099 = vadd.f32 %v825, %v1035
        %v1100 = vadd.f32 %v826, %v1036
        %v1101 = vadd.f32 %v827, %v1037
        %v1102 = vadd.f32 %v828, %v1038
        %v1103 = vadd.f32 %v829, %v1039
        %v1104 = vadd.f32 %v830, %v1040
        %v1105 = vadd.f32 %v831, %v1041
        %v1106 = vadd.f32 %v832, %v1042
        %v1107 = vadd.f32 %v833, %v1043
        %v1108 = vld [vmem:[%s2] sm:$0x3]
        %v1110 = vlaneseq
        %v1111 = vshrl.u32 %v1110, 7
        %v1112 = vsub.s32 0, %v1111
        %v1113 = vrot.slane %v1108, %v1112
        %v1114 = vlaneseq
        %v1115 = vshrl.u32 %v1114, 7
        %v1116 = vsub.s32 1, %v1115
        %v1117 = vrot.slane %v1108, %v1116
        %v1120 = vadd.f32 %v1044, %v1113
        %v1121 = vadd.f32 %v1045, %v1117
        %v1122 = vadd.f32 %v1046, %v1113
        %v1123 = vadd.f32 %v1047, %v1117
        %v1124 = vadd.f32 %v1048, %v1113
        %v1125 = vadd.f32 %v1049, %v1117
        %v1126 = vadd.f32 %v1050, %v1113
        %v1127 = vadd.f32 %v1051, %v1117
        %v1128 = vadd.f32 %v1052, %v1113
        %v1129 = vadd.f32 %v1053, %v1117
        %v1130 = vadd.f32 %v1054, %v1113
        %v1131 = vadd.f32 %v1055, %v1117
        %v1132 = vadd.f32 %v1056, %v1113
        %v1133 = vadd.f32 %v1057, %v1117
        %v1134 = vadd.f32 %v1058, %v1113
        %v1135 = vadd.f32 %v1059, %v1117
        %v1136 = vadd.f32 %v1060, %v1113
        %v1137 = vadd.f32 %v1061, %v1117
        %v1138 = vadd.f32 %v1062, %v1113
        %v1139 = vadd.f32 %v1063, %v1117
        %v1140 = vadd.f32 %v1064, %v1113
        %v1141 = vadd.f32 %v1065, %v1117
        %v1142 = vadd.f32 %v1066, %v1113
        %v1143 = vadd.f32 %v1067, %v1117
        %v1144 = vadd.f32 %v1068, %v1113
        %v1145 = vadd.f32 %v1069, %v1117
        %v1146 = vadd.f32 %v1070, %v1113
        %v1147 = vadd.f32 %v1071, %v1117
        %v1148 = vadd.f32 %v1072, %v1113
        %v1149 = vadd.f32 %v1073, %v1117
        %v1150 = vadd.f32 %v1074, %v1113
        %v1151 = vadd.f32 %v1075, %v1117
        %v1152 = vadd.f32 %v1076, %v1113
        %v1153 = vadd.f32 %v1077, %v1117
        %v1154 = vadd.f32 %v1078, %v1113
        %v1155 = vadd.f32 %v1079, %v1117
        %v1156 = vadd.f32 %v1080, %v1113
        %v1157 = vadd.f32 %v1081, %v1117
        %v1158 = vadd.f32 %v1082, %v1113
        %v1159 = vadd.f32 %v1083, %v1117
        %v1160 = vadd.f32 %v1084, %v1113
        %v1161 = vadd.f32 %v1085, %v1117
        %v1162 = vadd.f32 %v1086, %v1113
        %v1163 = vadd.f32 %v1087, %v1117
        %v1164 = vadd.f32 %v1088, %v1113
        %v1165 = vadd.f32 %v1089, %v1117
        %v1166 = vadd.f32 %v1090, %v1113
        %v1167 = vadd.f32 %v1091, %v1117
        %v1168 = vadd.f32 %v1092, %v1113
        %v1169 = vadd.f32 %v1093, %v1117
        %v1170 = vadd.f32 %v1094, %v1113
        %v1171 = vadd.f32 %v1095, %v1117
        %v1172 = vadd.f32 %v1096, %v1113
        %v1173 = vadd.f32 %v1097, %v1117
        %v1174 = vadd.f32 %v1098, %v1113
        %v1175 = vadd.f32 %v1099, %v1117
        %v1176 = vadd.f32 %v1100, %v1113
        %v1177 = vadd.f32 %v1101, %v1117
        %v1178 = vadd.f32 %v1102, %v1113
        %v1179 = vadd.f32 %v1103, %v1117
        %v1180 = vadd.f32 %v1104, %v1113
        %v1181 = vadd.f32 %v1105, %v1117
        %v1182 = vadd.f32 %v1106, %v1113
        %v1183 = vadd.f32 %v1107, %v1117
        %v1184 = vmax.f32 %v1120, 0.0
        %v1185 = vmax.f32 %v1121, 0.0
        %v1186 = vmax.f32 %v1122, 0.0
        %v1187 = vmax.f32 %v1123, 0.0
        %v1188 = vmax.f32 %v1124, 0.0
        %v1189 = vmax.f32 %v1125, 0.0
        %v1190 = vmax.f32 %v1126, 0.0
        %v1191 = vmax.f32 %v1127, 0.0
        %v1192 = vmax.f32 %v1128, 0.0
        %v1193 = vmax.f32 %v1129, 0.0
        %v1194 = vmax.f32 %v1130, 0.0
        %v1195 = vmax.f32 %v1131, 0.0
        %v1196 = vmax.f32 %v1132, 0.0
        %v1197 = vmax.f32 %v1133, 0.0
        %v1198 = vmax.f32 %v1134, 0.0
        %v1199 = vmax.f32 %v1135, 0.0
        %v1200 = vmax.f32 %v1136, 0.0
        %v1201 = vmax.f32 %v1137, 0.0
        %v1202 = vmax.f32 %v1138, 0.0
        %v1203 = vmax.f32 %v1139, 0.0
        %v1204 = vmax.f32 %v1140, 0.0
        %v1205 = vmax.f32 %v1141, 0.0
        %v1206 = vmax.f32 %v1142, 0.0
        %v1207 = vmax.f32 %v1143, 0.0
        %v1208 = vmax.f32 %v1144, 0.0
        %v1209 = vmax.f32 %v1145, 0.0
        %v1210 = vmax.f32 %v1146, 0.0
        %v1211 = vmax.f32 %v1147, 0.0
        %v1212 = vmax.f32 %v1148, 0.0
        %v1213 = vmax.f32 %v1149, 0.0
        %v1214 = vmax.f32 %v1150, 0.0
        %v1215 = vmax.f32 %v1151, 0.0
        %v1216 = vmax.f32 %v1152, 0.0
        %v1217 = vmax.f32 %v1153, 0.0
        %v1218 = vmax.f32 %v1154, 0.0
        %v1219 = vmax.f32 %v1155, 0.0
        %v1220 = vmax.f32 %v1156, 0.0
        %v1221 = vmax.f32 %v1157, 0.0
        %v1222 = vmax.f32 %v1158, 0.0
        %v1223 = vmax.f32 %v1159, 0.0
        %v1224 = vmax.f32 %v1160, 0.0
        %v1225 = vmax.f32 %v1161, 0.0
        %v1226 = vmax.f32 %v1162, 0.0
        %v1227 = vmax.f32 %v1163, 0.0
        %v1228 = vmax.f32 %v1164, 0.0
        %v1229 = vmax.f32 %v1165, 0.0
        %v1230 = vmax.f32 %v1166, 0.0
        %v1231 = vmax.f32 %v1167, 0.0
        %v1232 = vmax.f32 %v1168, 0.0
        %v1233 = vmax.f32 %v1169, 0.0
        %v1234 = vmax.f32 %v1170, 0.0
        %v1235 = vmax.f32 %v1171, 0.0
        %v1236 = vmax.f32 %v1172, 0.0
        %v1237 = vmax.f32 %v1173, 0.0
        %v1238 = vmax.f32 %v1174, 0.0
        %v1239 = vmax.f32 %v1175, 0.0
        %v1240 = vmax.f32 %v1176, 0.0
        %v1241 = vmax.f32 %v1177, 0.0
        %v1242 = vmax.f32 %v1178, 0.0
        %v1243 = vmax.f32 %v1179, 0.0
        %v1244 = vmax.f32 %v1180, 0.0
        %v1245 = vmax.f32 %v1181, 0.0
        %v1246 = vmax.f32 %v1182, 0.0
        %v1247 = vmax.f32 %v1183, 0.0
        %v1248 = vld [vmem:[#allocation2] sm:$0xff]
        %v1249 = vld [vmem:[#allocation2 + $0x8] sm:$0xff]
        %v1250 = vld [vmem:[#allocation2 + $0x10] sm:$0xff]
        %v1251 = vld [vmem:[#allocation2 + $0x18] sm:$0xff]
        %v1252 = vld [vmem:[#allocation2 + $0x20] sm:$0xff]
        %v1253 = vld [vmem:[#allocation2 + $0x28] sm:$0xff]
        %v1254 = vld [vmem:[#allocation2 + $0x30] sm:$0xff]
        %v1255 = vld [vmem:[#allocation2 + $0x38] sm:$0xff]
        %v1256 = vld [vmem:[#allocation2 + $0x40] sm:$0xff]
        %v1257 = vld [vmem:[#allocation2 + $0x48] sm:$0xff]
        %v1258 = vld [vmem:[#allocation2 + $0x50] sm:$0xff]
        %v1259 = vld [vmem:[#allocation2 + $0x58] sm:$0xff]
        %v1260 = vld [vmem:[#allocation2 + $0x60] sm:$0xff]
        %v1261 = vld [vmem:[#allocation2 + $0x68] sm:$0xff]
        %v1262 = vld [vmem:[#allocation2 + $0x70] sm:$0xff]
        %v1263 = vld [vmem:[#allocation2 + $0x78] sm:$0xff]
        %v1264 = vld [vmem:[#allocation2 + $0x80] sm:$0xff]
        %v1265 = vld [vmem:[#allocation2 + $0x88] sm:$0xff]
        %v1266 = vld [vmem:[#allocation2 + $0x90] sm:$0xff]
        %v1267 = vld [vmem:[#allocation2 + $0x98] sm:$0xff]
        %v1268 = vld [vmem:[#allocation2 + $0xa0] sm:$0xff]
        %v1269 = vld [vmem:[#allocation2 + $0xa8] sm:$0xff]
        %v1270 = vld [vmem:[#allocation2 + $0xb0] sm:$0xff]
        %v1271 = vld [vmem:[#allocation2 + $0xb8] sm:$0xff]
        %v1272 = vld [vmem:[#allocation2 + $0xc0] sm:$0xff]
        %v1273 = vld [vmem:[#allocation2 + $0xc8] sm:$0xff]
        %v1274 = vld [vmem:[#allocation2 + $0xd0] sm:$0xff]
        %v1275 = vld [vmem:[#allocation2 + $0xd8] sm:$0xff]
        %v1276 = vld [vmem:[#allocation2 + $0xe0] sm:$0xff]
        %v1277 = vld [vmem:[#allocation2 + $0xe8] sm:$0xff]
        %v1278 = vld [vmem:[#allocation2 + $0xf0] sm:$0xff]
        %v1279 = vld [vmem:[#allocation2 + $0xf8] sm:$0xff]
        %v1280 = vld [vmem:[#allocation2 + $0x100] sm:$0xff]
        %v1281 = vld [vmem:[#allocation2 + $0x108] sm:$0xff]
        %v1282 = vld [vmem:[#allocation2 + $0x110] sm:$0xff]
        %v1283 = vld [vmem:[#allocation2 + $0x118] sm:$0xff]
        %v1284 = vld [vmem:[#allocation2 + $0x120] sm:$0xff]
        %v1285 = vld [vmem:[#allocation2 + $0x128] sm:$0xff]
        %v1286 = vld [vmem:[#allocation2 + $0x130] sm:$0xff]
        %v1287 = vld [vmem:[#allocation2 + $0x138] sm:$0xff]
        %v1288 = vld [vmem:[#allocation2 + $0x140] sm:$0xff]
        %v1289 = vld [vmem:[#allocation2 + $0x148] sm:$0xff]
        %v1290 = vld [vmem:[#allocation2 + $0x150] sm:$0xff]
        %v1291 = vld [vmem:[#allocation2 + $0x158] sm:$0xff]
        %v1292 = vld [vmem:[#allocation2 + $0x160] sm:$0xff]
        %v1293 = vld [vmem:[#allocation2 + $0x168] sm:$0xff]
        %v1294 = vld [vmem:[#allocation2 + $0x170] sm:$0xff]
        %v1295 = vld [vmem:[#allocation2 + $0x178] sm:$0xff]
        %v1296 = vld [vmem:[#allocation2 + $0x180] sm:$0xff]
        %v1297 = vld [vmem:[#allocation2 + $0x188] sm:$0xff]
        %v1298 = vld [vmem:[#allocation2 + $0x190] sm:$0xff]
        %v1299 = vld [vmem:[#allocation2 + $0x198] sm:$0xff]
        %v1300 = vld [vmem:[#allocation2 + $0x1a0] sm:$0xff]
        %v1301 = vld [vmem:[#allocation2 + $0x1a8] sm:$0xff]
        %v1302 = vld [vmem:[#allocation2 + $0x1b0] sm:$0xff]
        %v1303 = vld [vmem:[#allocation2 + $0x1b8] sm:$0xff]
        %v1304 = vld [vmem:[#allocation2 + $0x1c0] sm:$0xff]
        %v1305 = vld [vmem:[#allocation2 + $0x1c8] sm:$0xff]
        %v1306 = vld [vmem:[#allocation2 + $0x1d0] sm:$0xff]
        %v1307 = vld [vmem:[#allocation2 + $0x1d8] sm:$0xff]
        %v1308 = vld [vmem:[#allocation2 + $0x1e0] sm:$0xff]
        %v1309 = vld [vmem:[#allocation2 + $0x1e8] sm:$0xff]
        %v1310 = vld [vmem:[#allocation2 + $0x1f0] sm:$0xff]
        %v1311 = vld [vmem:[#allocation2 + $0x1f8] sm:$0xff]
        %v1312 = vld [vmem:[#allocation2 + $0x200] sm:$0xff]
        %v1313 = vld [vmem:[#allocation2 + $0x208] sm:$0xff]
        %v1314 = vld [vmem:[#allocation2 + $0x210] sm:$0xff]
        %v1315 = vld [vmem:[#allocation2 + $0x218] sm:$0xff]
        %v1316 = vld [vmem:[#allocation2 + $0x220] sm:$0xff]
        %v1317 = vld [vmem:[#allocation2 + $0x228] sm:$0xff]
        %v1318 = vld [vmem:[#allocation2 + $0x230] sm:$0xff]
        %v1319 = vld [vmem:[#allocation2 + $0x238] sm:$0xff]
        %v1320 = vld [vmem:[#allocation2 + $0x240] sm:$0xff]
        %v1321 = vld [vmem:[#allocation2 + $0x248] sm:$0xff]
        %v1322 = vld [vmem:[#allocation2 + $0x250] sm:$0xff]
        %v1323 = vld [vmem:[#allocation2 + $0x258] sm:$0xff]
        %v1324 = vld [vmem:[#allocation2 + $0x260] sm:$0xff]
        %v1325 = vld [vmem:[#allocation2 + $0x268] sm:$0xff]
        %v1326 = vld [vmem:[#allocation2 + $0x270] sm:$0xff]
        %v1327 = vld [vmem:[#allocation2 + $0x278] sm:$0xff]
        %v1328 = vld [vmem:[#allocation2 + $0x280] sm:$0xff]
        %v1329 = vld [vmem:[#allocation2 + $0x288] sm:$0xff]
        %v1330 = vld [vmem:[#allocation2 + $0x290] sm:$0xff]
        %v1331 = vld [vmem:[#allocation2 + $0x298] sm:$0xff]
        %v1332 = vld [vmem:[#allocation2 + $0x2a0] sm:$0xff]
        %v1333 = vld [vmem:[#allocation2 + $0x2a8] sm:$0xff]
        %v1334 = vld [vmem:[#allocation2 + $0x2b0] sm:$0xff]
        %v1335 = vld [vmem:[#allocation2 + $0x2b8] sm:$0xff]
        %v1336 = vld [vmem:[#allocation2 + $0x2c0] sm:$0xff]
        %v1337 = vld [vmem:[#allocation2 + $0x2c8] sm:$0xff]
        %v1338 = vld [vmem:[#allocation2 + $0x2d0] sm:$0xff]
        %v1339 = vld [vmem:[#allocation2 + $0x2d8] sm:$0xff]
        %v1340 = vld [vmem:[#allocation2 + $0x2e0] sm:$0xff]
        %v1341 = vld [vmem:[#allocation2 + $0x2e8] sm:$0xff]
        %v1342 = vld [vmem:[#allocation2 + $0x2f0] sm:$0xff]
        %v1343 = vld [vmem:[#allocation2 + $0x2f8] sm:$0xff]
        %v1344 = vld [vmem:[%s280] sm:$0x7]
        %v1346 = vlaneseq
        %v1347 = vshrl.u32 %v1346, 7
        %v1348 = vsub.s32 0, %v1347
        %v1349 = vrot.slane %v1344, %v1348
        %v1350 = vlaneseq
        %v1351 = vshrl.u32 %v1350, 7
        %v1352 = vsub.s32 1, %v1351
        %v1353 = vrot.slane %v1344, %v1352
        %v1354 = vlaneseq
        %v1355 = vshrl.u32 %v1354, 7
        %v1356 = vsub.s32 2, %v1355
        %v1357 = vrot.slane %v1344, %v1356
        %1361 = vmatprep.subr.mxu0 %v1294
        %1362 = vmatpush1.msra.mxu0 %v1293
        %1363 = vmatprep.subr.mxu0 %v1291
        %1364 = vmatpush1.msra.mxu0 %v1290
        %1365 = vmatprep.subr.mxu0 %v1288
        %1366 = vmatpush1.msra.mxu0 %v1287
        %1367 = vmatprep.subr.mxu0 %v1285
        %1368 = vmatpush1.msra.mxu0 %v1284
        %1369 = vmatprep.subr.mxu0 %v1282
        %1370 = vmatpush1.msra.mxu0 %v1281
        %1371 = vmatprep.subr.mxu0 %v1279
        %1372 = vmatpush1.msra.mxu0 %v1278
        %1373 = vmatprep.subr.mxu0 %v1276
        %1374 = vmatpush1.msra.mxu0 %v1275
        %1375 = vmatprep.subr.mxu0 %v1273
        %1376 = vmatpush1.msra.mxu0 %v1272
        %1377 = vmatprep.subr.mxu0 %v1270
        %1378 = vmatpush1.msra.mxu0 %v1269
        %1379 = vmatprep.subr.mxu0 %v1267
        %1380 = vmatpush1.msra.mxu0 %v1266
        %1381 = vmatprep.subr.mxu0 %v1264
        %1382 = vmatpush1.msra.mxu0 %v1263
        %1383 = vmatprep.subr.mxu0 %v1261
        %1384 = vmatpush1.msra.mxu0 %v1260
        %1385 = vmatprep.subr.mxu0 %v1258
        %1386 = vmatpush1.msra.mxu0 %v1257
        %1387 = vmatprep.subr.mxu0 %v1255
        %1388 = vmatpush1.msra.mxu0 %v1254
        %1389 = vmatprep.subr.mxu0 %v1252
        %1390 = vmatpush1.msra.mxu0 %v1251
        %1391 = vmatprep.subr.mxu0 %v1249
        %1392 = vmatpush1.msra.mxu0 %v1248
        %1393 = vmatprep.subr.mxu0 %v1342
        %1394 = vmatpush2.msra.mxu0 %v1341
        %1395 = vmatprep.subr.mxu0 %v1339
        %1396 = vmatpush2.msra.mxu0 %v1338
        %1397 = vmatprep.subr.mxu0 %v1336
        %1398 = vmatpush2.msra.mxu0 %v1335
        %1399 = vmatprep.subr.mxu0 %v1333
        %1400 = vmatpush2.msra.mxu0 %v1332
        %1401 = vmatprep.subr.mxu0 %v1330
        %1402 = vmatpush2.msra.mxu0 %v1329
        %1403 = vmatprep.subr.mxu0 %v1327
        %1404 = vmatpush2.msra.mxu0 %v1326
        %1405 = vmatprep.subr.mxu0 %v1324
        %1406 = vmatpush2.msra.mxu0 %v1323
        %1407 = vmatprep.subr.mxu0 %v1321
        %1408 = vmatpush2.msra.mxu0 %v1320
        %1409 = vmatprep.subr.mxu0 %v1318
        %1410 = vmatpush2.msra.mxu0 %v1317
        %1411 = vmatprep.subr.mxu0 %v1315
        %1412 = vmatpush2.msra.mxu0 %v1314
        %1413 = vmatprep.subr.mxu0 %v1312
        %1414 = vmatpush2.msra.mxu0 %v1311
        %1415 = vmatprep.subr.mxu0 %v1309
        %1416 = vmatpush2.msra.mxu0 %v1308
        %1417 = vmatprep.subr.mxu0 %v1306
        %1418 = vmatpush2.msra.mxu0 %v1305
        %1419 = vmatprep.subr.mxu0 %v1303
        %1420 = vmatpush2.msra.mxu0 %v1302
        %1421 = vmatprep.subr.mxu0 %v1300
        %1422 = vmatpush2.msra.mxu0 %v1299
        %1423 = vmatprep.subr.mxu0 %v1297
        %1424 = vmatpush2.msra.mxu0 %v1296
        %1425 = vmatprep.mubr.f32.mxu0 %v1185
        %1426 = vmatmul.mubr.f32.gmra.mxu0 %v1184
        %v1427 = vpop.f32.mrf.mxu0
        %v1428 = vadd.f32 %v1349, %v1427
        %v1429 = vpop.f32.mrf.mxu0
        %v1430 = vadd.f32 %v1353, %v1429
        %1431 = vmatprep.mubr.f32.mxu0 %v1187
        %1432 = vmatmul.mubr.f32.gmra.mxu0 %v1186
        %v1433 = vpop.f32.mrf.mxu0
        %v1434 = vadd.f32 %v1349, %v1433
        %v1435 = vpop.f32.mrf.mxu0
        %v1436 = vadd.f32 %v1353, %v1435
        %1437 = vmatprep.mubr.f32.mxu0 %v1189
        %1438 = vmatmul.mubr.f32.gmra.mxu0 %v1188
        %v1439 = vpop.f32.mrf.mxu0
        %v1440 = vadd.f32 %v1349, %v1439
        %v1441 = vpop.f32.mrf.mxu0
        %v1442 = vadd.f32 %v1353, %v1441
        %1443 = vmatprep.mubr.f32.mxu0 %v1191
        %1444 = vmatmul.mubr.f32.gmra.mxu0 %v1190
        %v1445 = vpop.f32.mrf.mxu0
        %v1446 = vadd.f32 %v1349, %v1445
        %v1447 = vpop.f32.mrf.mxu0
        %v1448 = vadd.f32 %v1353, %v1447
        %1449 = vmatprep.mubr.f32.mxu0 %v1193
        %1450 = vmatmul.mubr.f32.gmra.mxu0 %v1192
        %v1451 = vpop.f32.mrf.mxu0
        %v1452 = vadd.f32 %v1349, %v1451
        %v1453 = vpop.f32.mrf.mxu0
        %v1454 = vadd.f32 %v1353, %v1453
        %1455 = vmatprep.mubr.f32.mxu0 %v1195
        %1456 = vmatmul.mubr.f32.gmra.mxu0 %v1194
        %v1457 = vpop.f32.mrf.mxu0
        %v1458 = vadd.f32 %v1349, %v1457
        %v1459 = vpop.f32.mrf.mxu0
        %v1460 = vadd.f32 %v1353, %v1459
        %1461 = vmatprep.mubr.f32.mxu0 %v1197
        %1462 = vmatmul.mubr.f32.gmra.mxu0 %v1196
        %v1463 = vpop.f32.mrf.mxu0
        %v1464 = vadd.f32 %v1349, %v1463
        %v1465 = vpop.f32.mrf.mxu0
        %v1466 = vadd.f32 %v1353, %v1465
        %1467 = vmatprep.mubr.f32.mxu0 %v1199
        %1468 = vmatmul.mubr.f32.gmra.mxu0 %v1198
        %v1469 = vpop.f32.mrf.mxu0
        %v1470 = vadd.f32 %v1349, %v1469
        %v1471 = vpop.f32.mrf.mxu0
        %v1472 = vadd.f32 %v1353, %v1471
        %1473 = vmatprep.mubr.f32.mxu0 %v1201
        %1474 = vmatmul.mubr.f32.gmra.mxu0 %v1200
        %v1475 = vpop.f32.mrf.mxu0
        %v1476 = vadd.f32 %v1349, %v1475
        %v1477 = vpop.f32.mrf.mxu0
        %v1478 = vadd.f32 %v1353, %v1477
        %1479 = vmatprep.mubr.f32.mxu0 %v1203
        %1480 = vmatmul.mubr.f32.gmra.mxu0 %v1202
        %v1481 = vpop.f32.mrf.mxu0
        %v1482 = vadd.f32 %v1349, %v1481
        %v1483 = vpop.f32.mrf.mxu0
        %v1484 = vadd.f32 %v1353, %v1483
        %1485 = vmatprep.mubr.f32.mxu0 %v1205
        %1486 = vmatmul.mubr.f32.gmra.mxu0 %v1204
        %v1487 = vpop.f32.mrf.mxu0
        %v1488 = vadd.f32 %v1349, %v1487
        %v1489 = vpop.f32.mrf.mxu0
        %v1490 = vadd.f32 %v1353, %v1489
        %1491 = vmatprep.mubr.f32.mxu0 %v1207
        %1492 = vmatmul.mubr.f32.gmra.mxu0 %v1206
        %v1493 = vpop.f32.mrf.mxu0
        %v1494 = vadd.f32 %v1349, %v1493
        %v1495 = vpop.f32.mrf.mxu0
        %v1496 = vadd.f32 %v1353, %v1495
        %1497 = vmatprep.mubr.f32.mxu0 %v1209
        %1498 = vmatmul.mubr.f32.gmra.mxu0 %v1208
        %v1499 = vpop.f32.mrf.mxu0
        %v1500 = vadd.f32 %v1349, %v1499
        %v1501 = vpop.f32.mrf.mxu0
        %v1502 = vadd.f32 %v1353, %v1501
        %1503 = vmatprep.mubr.f32.mxu0 %v1211
        %1504 = vmatmul.mubr.f32.gmra.mxu0 %v1210
        %v1505 = vpop.f32.mrf.mxu0
        %v1506 = vadd.f32 %v1349, %v1505
        %v1507 = vpop.f32.mrf.mxu0
        %v1508 = vadd.f32 %v1353, %v1507
        %1509 = vmatprep.mubr.f32.mxu0 %v1213
        %1510 = vmatmul.mubr.f32.gmra.mxu0 %v1212
        %v1511 = vpop.f32.mrf.mxu0
        %v1512 = vadd.f32 %v1349, %v1511
        %v1513 = vpop.f32.mrf.mxu0
        %v1514 = vadd.f32 %v1353, %v1513
        %1515 = vmatprep.mubr.f32.mxu0 %v1215
        %1516 = vmatmul.mubr.f32.gmra.mxu0 %v1214
        %v1517 = vpop.f32.mrf.mxu0
        %v1518 = vadd.f32 %v1349, %v1517
        %v1519 = vpop.f32.mrf.mxu0
        %v1520 = vadd.f32 %v1353, %v1519
        %1521 = vmatprep.mubr.f32.mxu0 %v1217
        %1522 = vmatmul.mubr.f32.gmra.mxu0 %v1216
        %v1523 = vpop.f32.mrf.mxu0
        %v1524 = vadd.f32 %v1349, %v1523
        %v1525 = vpop.f32.mrf.mxu0
        %v1526 = vadd.f32 %v1353, %v1525
        %1527 = vmatprep.mubr.f32.mxu0 %v1219
        %1528 = vmatmul.mubr.f32.gmra.mxu0 %v1218
        %v1529 = vpop.f32.mrf.mxu0
        %v1530 = vadd.f32 %v1349, %v1529
        %v1531 = vpop.f32.mrf.mxu0
        %v1532 = vadd.f32 %v1353, %v1531
        %1533 = vmatprep.mubr.f32.mxu0 %v1221
        %1534 = vmatmul.mubr.f32.gmra.mxu0 %v1220
        %v1535 = vpop.f32.mrf.mxu0
        %v1536 = vadd.f32 %v1349, %v1535
        %v1537 = vpop.f32.mrf.mxu0
        %v1538 = vadd.f32 %v1353, %v1537
        %1539 = vmatprep.mubr.f32.mxu0 %v1223
        %1540 = vmatmul.mubr.f32.gmra.mxu0 %v1222
        %v1541 = vpop.f32.mrf.mxu0
        %v1542 = vadd.f32 %v1349, %v1541
        %v1543 = vpop.f32.mrf.mxu0
        %v1544 = vadd.f32 %v1353, %v1543
        %1545 = vmatprep.mubr.f32.mxu0 %v1225
        %1546 = vmatmul.mubr.f32.gmra.mxu0 %v1224
        %v1547 = vpop.f32.mrf.mxu0
        %v1548 = vadd.f32 %v1349, %v1547
        %v1549 = vpop.f32.mrf.mxu0
        %v1550 = vadd.f32 %v1353, %v1549
        %1551 = vmatprep.mubr.f32.mxu0 %v1227
        %1552 = vmatmul.mubr.f32.gmra.mxu0 %v1226
        %v1553 = vpop.f32.mrf.mxu0
        %v1554 = vadd.f32 %v1349, %v1553
        %v1555 = vpop.f32.mrf.mxu0
        %v1556 = vadd.f32 %v1353, %v1555
        %1557 = vmatprep.mubr.f32.mxu0 %v1229
        %1558 = vmatmul.mubr.f32.gmra.mxu0 %v1228
        %v1559 = vpop.f32.mrf.mxu0
        %v1560 = vadd.f32 %v1349, %v1559
        %v1561 = vpop.f32.mrf.mxu0
        %v1562 = vadd.f32 %v1353, %v1561
        %1563 = vmatprep.mubr.f32.mxu0 %v1231
        %1564 = vmatmul.mubr.f32.gmra.mxu0 %v1230
        %v1565 = vpop.f32.mrf.mxu0
        %v1566 = vadd.f32 %v1349, %v1565
        %v1567 = vpop.f32.mrf.mxu0
        %v1568 = vadd.f32 %v1353, %v1567
        %1569 = vmatprep.mubr.f32.mxu0 %v1233
        %1570 = vmatmul.mubr.f32.gmra.mxu0 %v1232
        %v1571 = vpop.f32.mrf.mxu0
        %v1572 = vadd.f32 %v1349, %v1571
        %v1573 = vpop.f32.mrf.mxu0
        %v1574 = vadd.f32 %v1353, %v1573
        %1575 = vmatprep.mubr.f32.mxu0 %v1235
        %1576 = vmatmul.mubr.f32.gmra.mxu0 %v1234
        %v1577 = vpop.f32.mrf.mxu0
        %v1578 = vadd.f32 %v1349, %v1577
        %v1579 = vpop.f32.mrf.mxu0
        %v1580 = vadd.f32 %v1353, %v1579
        %1581 = vmatprep.mubr.f32.mxu0 %v1237
        %1582 = vmatmul.mubr.f32.gmra.mxu0 %v1236
        %v1583 = vpop.f32.mrf.mxu0
        %v1584 = vadd.f32 %v1349, %v1583
        %v1585 = vpop.f32.mrf.mxu0
        %v1586 = vadd.f32 %v1353, %v1585
        %1587 = vmatprep.mubr.f32.mxu0 %v1239
        %1588 = vmatmul.mubr.f32.gmra.mxu0 %v1238
        %v1589 = vpop.f32.mrf.mxu0
        %v1590 = vadd.f32 %v1349, %v1589
        %v1591 = vpop.f32.mrf.mxu0
        %v1592 = vadd.f32 %v1353, %v1591
        %1593 = vmatprep.mubr.f32.mxu0 %v1241
        %1594 = vmatmul.mubr.f32.gmra.mxu0 %v1240
        %v1595 = vpop.f32.mrf.mxu0
        %v1596 = vadd.f32 %v1349, %v1595
        %v1597 = vpop.f32.mrf.mxu0
        %v1598 = vadd.f32 %v1353, %v1597
        %1599 = vmatprep.mubr.f32.mxu0 %v1243
        %1600 = vmatmul.mubr.f32.gmra.mxu0 %v1242
        %v1601 = vpop.f32.mrf.mxu0
        %v1602 = vadd.f32 %v1349, %v1601
        %v1603 = vpop.f32.mrf.mxu0
        %v1604 = vadd.f32 %v1353, %v1603
        %1605 = vmatprep.mubr.f32.mxu0 %v1245
        %1606 = vmatmul.mubr.f32.gmra.mxu0 %v1244
        %v1607 = vpop.f32.mrf.mxu0
        %v1608 = vadd.f32 %v1349, %v1607
        %v1609 = vpop.f32.mrf.mxu0
        %v1610 = vadd.f32 %v1353, %v1609
        %1611 = vmatprep.mubr.f32.mxu0 %v1247
        %1612 = vmatmul.mubr.f32.gmra.mxu0 %v1246
        %v1613 = vpop.f32.mrf.mxu0
        %v1614 = vadd.f32 %v1349, %v1613
        %v1615 = vpop.f32.mrf.mxu0
        %v1616 = vadd.f32 %v1353, %v1615
        %1617 = vdwg.mxu0
        %1618 = vmatprep.subr.mxu0 0.0
        %1619 = vmatpush1.msra.mxu0 %v1295
        %1620 = vmatprep.subr.mxu0 0.0
        %1621 = vmatpush1.msra.mxu0 %v1292
        %1622 = vmatprep.subr.mxu0 0.0
        %1623 = vmatpush1.msra.mxu0 %v1289
        %1624 = vmatprep.subr.mxu0 0.0
        %1625 = vmatpush1.msra.mxu0 %v1286
        %1626 = vmatprep.subr.mxu0 0.0
        %1627 = vmatpush1.msra.mxu0 %v1283
        %1628 = vmatprep.subr.mxu0 0.0
        %1629 = vmatpush1.msra.mxu0 %v1280
        %1630 = vmatprep.subr.mxu0 0.0
        %1631 = vmatpush1.msra.mxu0 %v1277
        %1632 = vmatprep.subr.mxu0 0.0
        %1633 = vmatpush1.msra.mxu0 %v1274
        %1634 = vmatprep.subr.mxu0 0.0
        %1635 = vmatpush1.msra.mxu0 %v1271
        %1636 = vmatprep.subr.mxu0 0.0
        %1637 = vmatpush1.msra.mxu0 %v1268
        %1638 = vmatprep.subr.mxu0 0.0
        %1639 = vmatpush1.msra.mxu0 %v1265
        %1640 = vmatprep.subr.mxu0 0.0
        %1641 = vmatpush1.msra.mxu0 %v1262
        %1642 = vmatprep.subr.mxu0 0.0
        %1643 = vmatpush1.msra.mxu0 %v1259
        %1644 = vmatprep.subr.mxu0 0.0
        %1645 = vmatpush1.msra.mxu0 %v1256
        %1646 = vmatprep.subr.mxu0 0.0
        %1647 = vmatpush1.msra.mxu0 %v1253
        %1648 = vmatprep.subr.mxu0 0.0
        %1649 = vmatpush1.msra.mxu0 %v1250
        %1650 = vmatprep.subr.mxu0 0.0
        %1651 = vmatpush2.msra.mxu0 %v1343
        %1652 = vmatprep.subr.mxu0 0.0
        %1653 = vmatpush2.msra.mxu0 %v1340
        %1654 = vmatprep.subr.mxu0 0.0
        %1655 = vmatpush2.msra.mxu0 %v1337
        %1656 = vmatprep.subr.mxu0 0.0
        %1657 = vmatpush2.msra.mxu0 %v1334
        %1658 = vmatprep.subr.mxu0 0.0
        %1659 = vmatpush2.msra.mxu0 %v1331
        %1660 = vmatprep.subr.mxu0 0.0
        %1661 = vmatpush2.msra.mxu0 %v1328
        %1662 = vmatprep.subr.mxu0 0.0
        %1663 = vmatpush2.msra.mxu0 %v1325
        %1664 = vmatprep.subr.mxu0 0.0
        %1665 = vmatpush2.msra.mxu0 %v1322
        %1666 = vmatprep.subr.mxu0 0.0
        %1667 = vmatpush2.msra.mxu0 %v1319
        %1668 = vmatprep.subr.mxu0 0.0
        %1669 = vmatpush2.msra.mxu0 %v1316
        %1670 = vmatprep.subr.mxu0 0.0
        %1671 = vmatpush2.msra.mxu0 %v1313
        %1672 = vmatprep.subr.mxu0 0.0
        %1673 = vmatpush2.msra.mxu0 %v1310
        %1674 = vmatprep.subr.mxu0 0.0
        %1675 = vmatpush2.msra.mxu0 %v1307
        %1676 = vmatprep.subr.mxu0 0.0
        %1677 = vmatpush2.msra.mxu0 %v1304
        %1678 = vmatprep.subr.mxu0 0.0
        %1679 = vmatpush2.msra.mxu0 %v1301
        %1680 = vmatprep.subr.mxu0 0.0
        %1681 = vmatpush2.msra.mxu0 %v1298
        %1682 = vmatprep.mubr.f32.mxu0 %v1185
        %1683 = vmatmul.mubr.f32.gmra.mxu0 %v1184
        %v1684 = vpop.f32.mrf.mxu0
        %v1685 = vadd.f32 %v1357, %v1684
        %v1686 = vpop.f32.mrf.mxu0
        %1687 = vmatprep.mubr.f32.mxu0 %v1187
        %1688 = vmatmul.mubr.f32.gmra.mxu0 %v1186
        %v1689 = vpop.f32.mrf.mxu0
        %v1690 = vadd.f32 %v1357, %v1689
        %v1691 = vpop.f32.mrf.mxu0
        %1692 = vmatprep.mubr.f32.mxu0 %v1189
        %1693 = vmatmul.mubr.f32.gmra.mxu0 %v1188
        %v1694 = vpop.f32.mrf.mxu0
        %v1695 = vadd.f32 %v1357, %v1694
        %v1696 = vpop.f32.mrf.mxu0
        %1697 = vmatprep.mubr.f32.mxu0 %v1191
        %1698 = vmatmul.mubr.f32.gmra.mxu0 %v1190
        %v1699 = vpop.f32.mrf.mxu0
        %v1700 = vadd.f32 %v1357, %v1699
        %v1701 = vpop.f32.mrf.mxu0
        %1702 = vmatprep.mubr.f32.mxu0 %v1193
        %1703 = vmatmul.mubr.f32.gmra.mxu0 %v1192
        %v1704 = vpop.f32.mrf.mxu0
        %v1705 = vadd.f32 %v1357, %v1704
        %v1706 = vpop.f32.mrf.mxu0
        %1707 = vmatprep.mubr.f32.mxu0 %v1195
        %1708 = vmatmul.mubr.f32.gmra.mxu0 %v1194
        %v1709 = vpop.f32.mrf.mxu0
        %v1710 = vadd.f32 %v1357, %v1709
        %v1711 = vpop.f32.mrf.mxu0
        %1712 = vmatprep.mubr.f32.mxu0 %v1197
        %1713 = vmatmul.mubr.f32.gmra.mxu0 %v1196
        %v1714 = vpop.f32.mrf.mxu0
        %v1715 = vadd.f32 %v1357, %v1714
        %v1716 = vpop.f32.mrf.mxu0
        %1717 = vmatprep.mubr.f32.mxu0 %v1199
        %1718 = vmatmul.mubr.f32.gmra.mxu0 %v1198
        %v1719 = vpop.f32.mrf.mxu0
        %v1720 = vadd.f32 %v1357, %v1719
        %v1721 = vpop.f32.mrf.mxu0
        %1722 = vmatprep.mubr.f32.mxu0 %v1201
        %1723 = vmatmul.mubr.f32.gmra.mxu0 %v1200
        %v1724 = vpop.f32.mrf.mxu0
        %v1725 = vadd.f32 %v1357, %v1724
        %v1726 = vpop.f32.mrf.mxu0
        %1727 = vmatprep.mubr.f32.mxu0 %v1203
        %1728 = vmatmul.mubr.f32.gmra.mxu0 %v1202
        %v1729 = vpop.f32.mrf.mxu0
        %v1730 = vadd.f32 %v1357, %v1729
        %v1731 = vpop.f32.mrf.mxu0
        %1732 = vmatprep.mubr.f32.mxu0 %v1205
        %1733 = vmatmul.mubr.f32.gmra.mxu0 %v1204
        %v1734 = vpop.f32.mrf.mxu0
        %v1735 = vadd.f32 %v1357, %v1734
        %v1736 = vpop.f32.mrf.mxu0
        %1737 = vmatprep.mubr.f32.mxu0 %v1207
        %1738 = vmatmul.mubr.f32.gmra.mxu0 %v1206
        %v1739 = vpop.f32.mrf.mxu0
        %v1740 = vadd.f32 %v1357, %v1739
        %v1741 = vpop.f32.mrf.mxu0
        %1742 = vmatprep.mubr.f32.mxu0 %v1209
        %1743 = vmatmul.mubr.f32.gmra.mxu0 %v1208
        %v1744 = vpop.f32.mrf.mxu0
        %v1745 = vadd.f32 %v1357, %v1744
        %v1746 = vpop.f32.mrf.mxu0
        %1747 = vmatprep.mubr.f32.mxu0 %v1211
        %1748 = vmatmul.mubr.f32.gmra.mxu0 %v1210
        %v1749 = vpop.f32.mrf.mxu0
        %v1750 = vadd.f32 %v1357, %v1749
        %v1751 = vpop.f32.mrf.mxu0
        %1752 = vmatprep.mubr.f32.mxu0 %v1213
        %1753 = vmatmul.mubr.f32.gmra.mxu0 %v1212
        %v1754 = vpop.f32.mrf.mxu0
        %v1755 = vadd.f32 %v1357, %v1754
        %v1756 = vpop.f32.mrf.mxu0
        %1757 = vmatprep.mubr.f32.mxu0 %v1215
        %1758 = vmatmul.mubr.f32.gmra.mxu0 %v1214
        %v1759 = vpop.f32.mrf.mxu0
        %v1760 = vadd.f32 %v1357, %v1759
        %v1761 = vpop.f32.mrf.mxu0
        %1762 = vmatprep.mubr.f32.mxu0 %v1217
        %1763 = vmatmul.mubr.f32.gmra.mxu0 %v1216
        %v1764 = vpop.f32.mrf.mxu0
        %v1765 = vadd.f32 %v1357, %v1764
        %v1766 = vpop.f32.mrf.mxu0
        %1767 = vmatprep.mubr.f32.mxu0 %v1219
        %1768 = vmatmul.mubr.f32.gmra.mxu0 %v1218
        %v1769 = vpop.f32.mrf.mxu0
        %v1770 = vadd.f32 %v1357, %v1769
        %v1771 = vpop.f32.mrf.mxu0
        %1772 = vmatprep.mubr.f32.mxu0 %v1221
        %1773 = vmatmul.mubr.f32.gmra.mxu0 %v1220
        %v1774 = vpop.f32.mrf.mxu0
        %v1775 = vadd.f32 %v1357, %v1774
        %v1776 = vpop.f32.mrf.mxu0
        %1777 = vmatprep.mubr.f32.mxu0 %v1223
        %1778 = vmatmul.mubr.f32.gmra.mxu0 %v1222
        %v1779 = vpop.f32.mrf.mxu0
        %v1780 = vadd.f32 %v1357, %v1779
        %v1781 = vpop.f32.mrf.mxu0
        %1782 = vmatprep.mubr.f32.mxu0 %v1225
        %1783 = vmatmul.mubr.f32.gmra.mxu0 %v1224
        %v1784 = vpop.f32.mrf.mxu0
        %v1785 = vadd.f32 %v1357, %v1784
        %v1786 = vpop.f32.mrf.mxu0
        %1787 = vmatprep.mubr.f32.mxu0 %v1227
        %1788 = vmatmul.mubr.f32.gmra.mxu0 %v1226
        %v1789 = vpop.f32.mrf.mxu0
        %v1790 = vadd.f32 %v1357, %v1789
        %v1791 = vpop.f32.mrf.mxu0
        %1792 = vmatprep.mubr.f32.mxu0 %v1229
        %1793 = vmatmul.mubr.f32.gmra.mxu0 %v1228
        %v1794 = vpop.f32.mrf.mxu0
        %v1795 = vadd.f32 %v1357, %v1794
        %v1796 = vpop.f32.mrf.mxu0
        %1797 = vmatprep.mubr.f32.mxu0 %v1231
        %1798 = vmatmul.mubr.f32.gmra.mxu0 %v1230
        %v1799 = vpop.f32.mrf.mxu0
        %v1800 = vadd.f32 %v1357, %v1799
        %v1801 = vpop.f32.mrf.mxu0
        %1802 = vmatprep.mubr.f32.mxu0 %v1233
        %1803 = vmatmul.mubr.f32.gmra.mxu0 %v1232
        %v1804 = vpop.f32.mrf.mxu0
        %v1805 = vadd.f32 %v1357, %v1804
        %v1806 = vpop.f32.mrf.mxu0
        %1807 = vmatprep.mubr.f32.mxu0 %v1235
        %1808 = vmatmul.mubr.f32.gmra.mxu0 %v1234
        %v1809 = vpop.f32.mrf.mxu0
        %v1810 = vadd.f32 %v1357, %v1809
        %v1811 = vpop.f32.mrf.mxu0
        %1812 = vmatprep.mubr.f32.mxu0 %v1237
        %1813 = vmatmul.mubr.f32.gmra.mxu0 %v1236
        %v1814 = vpop.f32.mrf.mxu0
        %v1815 = vadd.f32 %v1357, %v1814
        %v1816 = vpop.f32.mrf.mxu0
        %1817 = vmatprep.mubr.f32.mxu0 %v1239
        %1818 = vmatmul.mubr.f32.gmra.mxu0 %v1238
        %v1819 = vpop.f32.mrf.mxu0
        %v1820 = vadd.f32 %v1357, %v1819
        %v1821 = vpop.f32.mrf.mxu0
        %1822 = vmatprep.mubr.f32.mxu0 %v1241
        %1823 = vmatmul.mubr.f32.gmra.mxu0 %v1240
        %v1824 = vpop.f32.mrf.mxu0
        %v1825 = vadd.f32 %v1357, %v1824
        %v1826 = vpop.f32.mrf.mxu0
        %1827 = vmatprep.mubr.f32.mxu0 %v1243
        %1828 = vmatmul.mubr.f32.gmra.mxu0 %v1242
        %v1829 = vpop.f32.mrf.mxu0
        %v1830 = vadd.f32 %v1357, %v1829
        %v1831 = vpop.f32.mrf.mxu0
        %1832 = vmatprep.mubr.f32.mxu0 %v1245
        %1833 = vmatmul.mubr.f32.gmra.mxu0 %v1244
        %v1834 = vpop.f32.mrf.mxu0
        %v1835 = vadd.f32 %v1357, %v1834
        %v1836 = vpop.f32.mrf.mxu0
        %1837 = vmatprep.mubr.f32.mxu0 %v1247
        %1838 = vmatmul.mubr.f32.gmra.mxu0 %v1246
        %v1839 = vpop.f32.mrf.mxu0
        %v1840 = vadd.f32 %v1357, %v1839
        %v1841 = vpop.f32.mrf.mxu0
        %1842 = vdwg.mxu0
        %1843 = vst [vmem:[%s269] sm:$0xff] %v1428
        %1844 = vst [vmem:[%s269 + $0x8] sm:$0xff] %v1430
        %1845 = vst [vmem:[%s269 + $0x10] sm:$0xff] %v1685
        %1846 = vst [vmem:[%s269 + $0x18] sm:$0xff] %v1434
        %1847 = vst [vmem:[%s269 + $0x20] sm:$0xff] %v1436
        %1848 = vst [vmem:[%s269 + $0x28] sm:$0xff] %v1690
        %1849 = vst [vmem:[%s269 + $0x30] sm:$0xff] %v1440
        %1850 = vst [vmem:[%s269 + $0x38] sm:$0xff] %v1442
        %1851 = vst [vmem:[%s269 + $0x40] sm:$0xff] %v1695
        %1852 = vst [vmem:[%s269 + $0x48] sm:$0xff] %v1446
        %1853 = vst [vmem:[%s269 + $0x50] sm:$0xff] %v1448
        %1854 = vst [vmem:[%s269 + $0x58] sm:$0xff] %v1700
        %1855 = vst [vmem:[%s269 + $0x60] sm:$0xff] %v1452
        %1856 = vst [vmem:[%s269 + $0x68] sm:$0xff] %v1454
        %1857 = vst [vmem:[%s269 + $0x70] sm:$0xff] %v1705
        %1858 = vst [vmem:[%s269 + $0x78] sm:$0xff] %v1458
        %1859 = vst [vmem:[%s269 + $0x80] sm:$0xff] %v1460
        %1860 = vst [vmem:[%s269 + $0x88] sm:$0xff] %v1710
        %1861 = vst [vmem:[%s269 + $0x90] sm:$0xff] %v1464
        %1862 = vst [vmem:[%s269 + $0x98] sm:$0xff] %v1466
        %1863 = vst [vmem:[%s269 + $0xa0] sm:$0xff] %v1715
        %1864 = vst [vmem:[%s269 + $0xa8] sm:$0xff] %v1470
        %1865 = vst [vmem:[%s269 + $0xb0] sm:$0xff] %v1472
        %1866 = vst [vmem:[%s269 + $0xb8] sm:$0xff] %v1720
        %1867 = vst [vmem:[%s269 + $0xc0] sm:$0xff] %v1476
        %1868 = vst [vmem:[%s269 + $0xc8] sm:$0xff] %v1478
        %1869 = vst [vmem:[%s269 + $0xd0] sm:$0xff] %v1725
        %1870 = vst [vmem:[%s269 + $0xd8] sm:$0xff] %v1482
        %1871 = vst [vmem:[%s269 + $0xe0] sm:$0xff] %v1484
        %1872 = vst [vmem:[%s269 + $0xe8] sm:$0xff] %v1730
        %1873 = vst [vmem:[%s269 + $0xf0] sm:$0xff] %v1488
        %1874 = vst [vmem:[%s269 + $0xf8] sm:$0xff] %v1490
        %1875 = vst [vmem:[%s269 + $0x100] sm:$0xff] %v1735
        %1876 = vst [vmem:[%s269 + $0x108] sm:$0xff] %v1494
        %1877 = vst [vmem:[%s269 + $0x110] sm:$0xff] %v1496
        %1878 = vst [vmem:[%s269 + $0x118] sm:$0xff] %v1740
        %1879 = vst [vmem:[%s269 + $0x120] sm:$0xff] %v1500
        %1880 = vst [vmem:[%s269 + $0x128] sm:$0xff] %v1502
        %1881 = vst [vmem:[%s269 + $0x130] sm:$0xff] %v1745
        %1882 = vst [vmem:[%s269 + $0x138] sm:$0xff] %v1506
        %1883 = vst [vmem:[%s269 + $0x140] sm:$0xff] %v1508
        %1884 = vst [vmem:[%s269 + $0x148] sm:$0xff] %v1750
        %1885 = vst [vmem:[%s269 + $0x150] sm:$0xff] %v1512
        %1886 = vst [vmem:[%s269 + $0x158] sm:$0xff] %v1514
        %1887 = vst [vmem:[%s269 + $0x160] sm:$0xff] %v1755
        %1888 = vst [vmem:[%s269 + $0x168] sm:$0xff] %v1518
        %1889 = vst [vmem:[%s269 + $0x170] sm:$0xff] %v1520
        %1890 = vst [vmem:[%s269 + $0x178] sm:$0xff] %v1760
        %1891 = vst [vmem:[%s269 + $0x180] sm:$0xff] %v1524
        %1892 = vst [vmem:[%s269 + $0x188] sm:$0xff] %v1526
        %1893 = vst [vmem:[%s269 + $0x190] sm:$0xff] %v1765
        %1894 = vst [vmem:[%s269 + $0x198] sm:$0xff] %v1530
        %1895 = vst [vmem:[%s269 + $0x1a0] sm:$0xff] %v1532
        %1896 = vst [vmem:[%s269 + $0x1a8] sm:$0xff] %v1770
        %1897 = vst [vmem:[%s269 + $0x1b0] sm:$0xff] %v1536
        %1898 = vst [vmem:[%s269 + $0x1b8] sm:$0xff] %v1538
        %1899 = vst [vmem:[%s269 + $0x1c0] sm:$0xff] %v1775
        %1900 = vst [vmem:[%s269 + $0x1c8] sm:$0xff] %v1542
        %1901 = vst [vmem:[%s269 + $0x1d0] sm:$0xff] %v1544
        %1902 = vst [vmem:[%s269 + $0x1d8] sm:$0xff] %v1780
        %1903 = vst [vmem:[%s269 + $0x1e0] sm:$0xff] %v1548
        %1904 = vst [vmem:[%s269 + $0x1e8] sm:$0xff] %v1550
        %1905 = vst [vmem:[%s269 + $0x1f0] sm:$0xff] %v1785
        %1906 = vst [vmem:[%s269 + $0x1f8] sm:$0xff] %v1554
        %1907 = vst [vmem:[%s269 + $0x200] sm:$0xff] %v1556
        %1908 = vst [vmem:[%s269 + $0x208] sm:$0xff] %v1790
        %1909 = vst [vmem:[%s269 + $0x210] sm:$0xff] %v1560
        %1910 = vst [vmem:[%s269 + $0x218] sm:$0xff] %v1562
        %1911 = vst [vmem:[%s269 + $0x220] sm:$0xff] %v1795
        %1912 = vst [vmem:[%s269 + $0x228] sm:$0xff] %v1566
        %1913 = vst [vmem:[%s269 + $0x230] sm:$0xff] %v1568
        %1914 = vst [vmem:[%s269 + $0x238] sm:$0xff] %v1800
        %1915 = vst [vmem:[%s269 + $0x240] sm:$0xff] %v1572
        %1916 = vst [vmem:[%s269 + $0x248] sm:$0xff] %v1574
        %1917 = vst [vmem:[%s269 + $0x250] sm:$0xff] %v1805
        %1918 = vst [vmem:[%s269 + $0x258] sm:$0xff] %v1578
        %1919 = vst [vmem:[%s269 + $0x260] sm:$0xff] %v1580
        %1920 = vst [vmem:[%s269 + $0x268] sm:$0xff] %v1810
        %1921 = vst [vmem:[%s269 + $0x270] sm:$0xff] %v1584
        %1922 = vst [vmem:[%s269 + $0x278] sm:$0xff] %v1586
        %1923 = vst [vmem:[%s269 + $0x280] sm:$0xff] %v1815
        %1924 = vst [vmem:[%s269 + $0x288] sm:$0xff] %v1590
        %1925 = vst [vmem:[%s269 + $0x290] sm:$0xff] %v1592
        %1926 = vst [vmem:[%s269 + $0x298] sm:$0xff] %v1820
        %1927 = vst [vmem:[%s269 + $0x2a0] sm:$0xff] %v1596
        %1928 = vst [vmem:[%s269 + $0x2a8] sm:$0xff] %v1598
        %1929 = vst [vmem:[%s269 + $0x2b0] sm:$0xff] %v1825
        %1930 = vst [vmem:[%s269 + $0x2b8] sm:$0xff] %v1602
        %1931 = vst [vmem:[%s269 + $0x2c0] sm:$0xff] %v1604
        %1932 = vst [vmem:[%s269 + $0x2c8] sm:$0xff] %v1830
        %1933 = vst [vmem:[%s269 + $0x2d0] sm:$0xff] %v1608
        %1934 = vst [vmem:[%s269 + $0x2d8] sm:$0xff] %v1610
        %1935 = vst [vmem:[%s269 + $0x2e0] sm:$0xff] %v1835
        %1936 = vst [vmem:[%s269 + $0x2e8] sm:$0xff] %v1614
        %1937 = vst [vmem:[%s269 + $0x2f0] sm:$0xff] %v1616
        %1938 = vst [vmem:[%s269 + $0x2f8] sm:$0xff] %v1840
        %s1939 = sand.u32 %s162, 1
        %s1940 = scalar_lea.sflag [#allocation4], %s1939
        %s1941 = sand.u32 %s162, 1
        %s1942 = smul.addr %s1941, 768
        %s1943 = scalar_lea.vmem [#allocation5], %s1942
        // Predicated region
        $region45: #{tpu_custom_call.1} parent=39 // pred_check
          %p1944 = pneg %p172
        $region46: #{tpu_custom_call.1} parent=39 // pred_check_branch
          %1946 = sbr.rel (%p1944) target = $region48
        $region47: #{tpu_custom_call.1} parent=39 // pred_region
          %s1947 = smul.u32 32, %s25
          %s1948 = smul.u32 3, %s24
          %s1950 = ssub.s32 12288, 12288
          %1951 = vsyncadd %s1940, %s1950
          %s1952 = smul.addr %s1947, 3
          %s1953 = sadd.s32 %s1948, %s1952
          %s1954 = smul.addr %s1953, 128
          %s1955 = scalar_lea.hbm %s5, %s1954
          %s1956 = sshll.u32 %s1943, 4
          %s1957 = int_to_ptr.vmem [resolvable:$true] %s1956
          %1962 = dma.vmem_to_hbm [thread:$0]  %s1957, 12288, %s1955, %s1940, 384, 384, 24
        $region48: #{tpu_custom_call.1} parent=39 // pred_fallthru
          _
      $region40: #{tpu_custom_call.1} parent=5 // pred_fallthru
        _
      %p1963 = scmp.le.s32.totalorder 2, %s15
      // Predicated region
      $region49: #{tpu_custom_call.1} parent=5 // pred_check
        %p1964 = pneg %p1963
      $region50: #{tpu_custom_call.1} parent=5 // pred_check_branch
        %1966 = sbr.rel (%p1964) target = $region52
      $region51: #{tpu_custom_call.1} parent=5 // pred_region
        %s1967 = ssub.s32 %s15, 2
        // Predicated region
        $region53: #{tpu_custom_call.1} parent=51 // pred_check
          %p1968 = pneg %p178
        $region54: #{tpu_custom_call.1} parent=51 // pred_check_branch
          %1970 = sbr.rel (%p1968) target = $region56
        $region55: #{tpu_custom_call.1} parent=51 // pred_region
          %s1971 = sand.u32 %s163, 1
          %s1972 = scalar_lea.sflag [#allocation4], %s1971
          %s1973 = sand.u32 %s163, 1
          %s1974 = smul.addr %s1973, 768
          %s1975 = scalar_lea.vmem [#allocation5], %s1974
          %1976 = dma.done %s1972, 12288
        $region56: #{tpu_custom_call.1} parent=51 // pred_fallthru
          _
      $region52: #{tpu_custom_call.1} parent=5 // pred_fallthru
        _
    $region6: #{tpu_custom_call.1} parent=1 // loop_footer
      %s19 = sadd.s32 1, %s15
    $region7: #{tpu_custom_call.1} parent=1 // loop_footer_branch
      %14 = sbr.rel target = $region3
    $region8: #{tpu_custom_call.1} parent=1 // loop_exit
      _
    %1977 = vsyncpa [#allocation3], 1
    %s1978 = scalar_lea.sflag [#allocation3], 1
    %1979 = vsyncpa %s1978, 1
    %1980 = vsyncpa [#allocation4], 1
    %s1981 = scalar_lea.sflag [#allocation4], 1
    %1982 = vsyncpa %s1981, 1

</llo_original>
